<compile_context>
chip_gen: v5e
topology: v5e:2x2
jax: 0.10.0
libtpu: 0.0.40
codegen_flags: <defaults>
</compile_context>

<pallas_src>
import jax
import jax.numpy as jnp
from jax.experimental import pallas as pl
from jax.experimental.pallas import tpu as pltpu

K_IN = 28 * 28      # 784 — full last dim of x, so no lane padding required
H1 = 128
H2 = 64
N_LOGITS = 10
N_OUT = 128          # logits zero-padded to a lane-dense 128 for unmasked stores
MAX_TB = 1024        # max batch tile (multiple of 8)


def _round_up(v, m):
    return ((v + m - 1) // m) * m


def _make_mlp_kernel(compute_dtype):
    # Exact fp32 matmuls when asked for fp32 parity; MXU-native bf16 otherwise.
    mxu_precision = (jax.lax.Precision.HIGHEST
                     if compute_dtype == jnp.float32 else jax.lax.Precision.DEFAULT)

    def mlp_kernel(x_ref, w1_ref, b1_ref, w2_ref, b2_ref, w3_ref, b3_ref, o_ref):
        # In-kernel cast of the activation tile (avoids a wrapper-side HBM round trip).
        x = x_ref[...].astype(compute_dtype)
        # fc1 + ReLU (Dropout(p=0.2) is identity in eval mode). Biases/ReLU stay fp32.
        h1 = jnp.dot(x, w1_ref[...], preferred_element_type=jnp.float32,
                     precision=mxu_precision)
        h1 = jnp.maximum(h1 + b1_ref[...], 0.0)
        # fc2 + ReLU
        h2 = jnp.dot(h1.astype(compute_dtype), w2_ref[...],
                     preferred_element_type=jnp.float32, precision=mxu_precision)
        h2 = jnp.maximum(h2 + b2_ref[...], 0.0)
        # fc3 (logits). Padded output lanes stay exactly zero (zero-padded w3/b3).
        h3 = jnp.dot(h2.astype(compute_dtype), w3_ref[...],
                     preferred_element_type=jnp.float32, precision=mxu_precision)
        o_ref[...] = (h3 + b3_ref[...]).astype(o_ref.dtype)

    return mlp_kernel


def neural_net_forward(x_nchw, params, *, compute_dtype=jnp.bfloat16, max_tile=MAX_TB):
    """x_nchw: (B, 1, 28, 28). Returns logits (B, 10) in float32."""
    w1, b1, w2, b2, w3, b3 = params
    B = x_nchw.shape[0]

    # torch's x.view(-1, 784) — no dtype cast, no K padding.
    x = x_nchw.reshape(B, K_IN)

    # Adaptive batch tile (multiple of 8); keep >=2 grid steps when B allows it.
    tb = min(max_tile, max(8, _round_up(pl.cdiv(B, 2), 8)))
    b_pad = _round_up(B, tb)
    if b_pad != B:
        x = jnp.pad(x, ((0, b_pad - B), (0, 0)))  # small ragged-tail pad only

    # Tiny weights: cast to compute dtype; zero-pad only the logit dim 10 -> 128.
    w1c = w1.astype(compute_dtype)
    w2c = w2.astype(compute_dtype)
    w3c = jnp.pad(w3, ((0, 0), (0, N_OUT - w3.shape[1]))).astype(compute_dtype)
    b1f = b1.astype(jnp.float32)
    b2f = b2.astype(jnp.float32)
    b3f = jnp.pad(b3, ((0, 0), (0, N_OUT - b3.shape[1]))).astype(jnp.float32)

    w_item = jnp.dtype(compute_dtype).itemsize
    cost = pl.CostEstimate(
        flops=2 * b_pad * (K_IN * H1 + H1 * H2 + H2 * N_OUT),
        transcendentals=0,
        bytes_accessed=(b_pad * K_IN * x.dtype.itemsize
                        + (K_IN * H1 + H1 * H2 + H2 * N_OUT) * w_item
                        + (H1 + H2 + N_OUT) * 4
                        + b_pad * N_OUT * 4),
    )

    const = lambda i: (0, 0)
    out = pl.pallas_call(
        _make_mlp_kernel(compute_dtype),
        out_shape=jax.ShapeDtypeStruct((b_pad, N_OUT), jnp.float32),
        grid_spec=pltpu.PrefetchScalarGridSpec(
            num_scalar_prefetch=0,
            grid=(b_pad // tb,),
            in_specs=[
                pl.BlockSpec((tb, K_IN), lambda i: (i, 0)),  # activations: pipelined DMA
                pl.BlockSpec((K_IN, H1), const),             # weights: VMEM-resident
                pl.BlockSpec((1, H1), const),
                pl.BlockSpec((H1, H2), const),
                pl.BlockSpec((1, H2), const),
                pl.BlockSpec((H2, N_OUT), const),
                pl.BlockSpec((1, N_OUT), const),
            ],
            out_specs=pl.BlockSpec((tb, N_OUT), lambda i: (i, 0)),
        ),
        compiler_params=pltpu.CompilerParams(
            dimension_semantics=("parallel",),   # 2x TC sharding on v7x, free elsewhere
            vmem_limit_bytes=32 * 1024 * 1024,   # ~8 MiB actually used at tb=1024
        ),
        cost_estimate=cost,
    )(x, w1c, b1f, w2c, b2f, w3c, b3f)

    # Drop padded batch rows and padded logit lanes.
    return out[:B, :N_LOGITS]


def init_params(key):
    """Deterministic parameter init (shapes match the nn.Linear layers in NeuralNet)."""
    k1, k2, k3, k4, k5, k6 = jax.random.split(key, 6)
    # Stored as (in, out) so the kernel does x @ W (PyTorch stores (out, in), does x @ W.T).
    w1 = jax.random.normal(k1, (784, 128), jnp.float32) * 0.02
    b1 = jax.random.normal(k2, (1, 128), jnp.float32) * 0.01
    w2 = jax.random.normal(k3, (128, 64), jnp.float32) * 0.02
    b2 = jax.random.normal(k4, (1, 64), jnp.float32) * 0.01
    w3 = jax.random.normal(k5, (64, 10), jnp.float32) * 0.02
    b3 = jax.random.normal(k6, (1, 10), jnp.float32) * 0.01
    return (w1, b1, w2, b2, w3, b3)


if __name__ == "__main__":
    key = jax.random.PRNGKey(0)
    kx, kp = jax.random.split(key)

    # Small batch of MNIST-like images, NCHW as PyTorch would feed.
    B = 8
    x = jax.random.normal(kx, (B, 1, 28, 28), jnp.float32)
    params = init_params(kp)

    # Plain-JAX fp32 reference (eval mode: dropout = identity), exact fp32 matmuls.
    w1, b1, w2, b2, w3, b3 = params
    hi = jax.lax.Precision.HIGHEST
    xf = x.reshape(B, 784)
    ref = jnp.maximum(jnp.dot(xf, w1, precision=hi) + b1, 0.0)
    ref = jnp.maximum(jnp.dot(ref, w2, precision=hi) + b2, 0.0)
    ref = jnp.dot(ref, w3, precision=hi) + b3

    # fp32 compute path: exact-precision MXU matmuls, tight tolerance.
    logits_f32 = neural_net_forward(x, params, compute_dtype=jnp.float32)
    jax.block_until_ready(logits_f32)
    assert logits_f32.shape == (B, 10)
    assert jnp.allclose(logits_f32, ref, atol=2e-4, rtol=2e-4)

    # bf16 compute path (default; MXU-native on v6e/v7x, fp32 accumulation).
    logits_bf16 = neural_net_forward(x, params, compute_dtype=jnp.bfloat16)
    jax.block_until_ready(logits_bf16)
    assert logits_bf16.shape == (B, 10)
    assert jnp.allclose(logits_bf16, ref, atol=5e-2, rtol=5e-2)

    print("KERNEL_OK")
</pallas_src>

<mosaic_0001>
module attributes {stable_mosaic.version = 11 : i64} {
  func.func @mlp_kernel(%arg0: i32, %arg1: memref<8x784xf32, #tpu.memory_space<vmem>>, %arg2: memref<784x128xf32, #tpu.memory_space<vmem>>, %arg3: memref<1x128xf32, #tpu.memory_space<vmem>>, %arg4: memref<128x64xf32, #tpu.memory_space<vmem>>, %arg5: memref<1x64xf32, #tpu.memory_space<vmem>>, %arg6: memref<64x128xf32, #tpu.memory_space<vmem>>, %arg7: memref<1x128xf32, #tpu.memory_space<vmem>>, %arg8: memref<8x128xf32, #tpu.memory_space<vmem>>) attributes {dimension_semantics = [#tpu.dimension_semantics<parallel>], iteration_bounds = array<i64: 1>, scalar_prefetch = 0 : i64, scratch_operands = 0 : i64, tpu.core_type = #tpu.core_type<tc>, window_params = [{transform_indices = @transform_0, window_bounds = array<i64: 8, 784>}, {pipeline_mode = #tpu.pipeline_mode<synchronous>, transform_indices = @transform_1, window_bounds = array<i64: 784, 128>}, {pipeline_mode = #tpu.pipeline_mode<synchronous>, transform_indices = @transform_2, window_bounds = array<i64: 1, 128>}, {pipeline_mode = #tpu.pipeline_mode<synchronous>, transform_indices = @transform_3, window_bounds = array<i64: 128, 64>}, {pipeline_mode = #tpu.pipeline_mode<synchronous>, transform_indices = @transform_4, window_bounds = array<i64: 1, 64>}, {pipeline_mode = #tpu.pipeline_mode<synchronous>, transform_indices = @transform_5, window_bounds = array<i64: 64, 128>}, {pipeline_mode = #tpu.pipeline_mode<synchronous>, transform_indices = @transform_6, window_bounds = array<i64: 1, 128>}, {transform_indices = @transform_7, window_bounds = array<i64: 8, 128>}]} {
    %c0 = arith.constant 0 : index
    %c0_0 = arith.constant 0 : index
    %0 = vector.load %arg1[%c0, %c0_0] : memref<8x784xf32, #tpu.memory_space<vmem>>, vector<8x784xf32>
    %c0_1 = arith.constant 0 : index
    %c0_2 = arith.constant 0 : index
    %1 = vector.load %arg2[%c0_1, %c0_2] : memref<784x128xf32, #tpu.memory_space<vmem>>, vector<784x128xf32>
    %cst = arith.constant dense<0.000000e+00> : vector<8x128xf32>
    %2 = tpu.matmul %0, %1, %cst {dimension_numbers = #tpu.dot_dimension_numbers<[1], [0], [0], [1], [0, 0, 1, 1], [], []>, precision = #tpu.contract_precision<fp32>} : vector<8x784xf32>, vector<784x128xf32>, vector<8x128xf32> -> vector<8x128xf32>
    %c0_3 = arith.constant 0 : index
    %c0_4 = arith.constant 0 : index
    %3 = vector.load %arg3[%c0_3, %c0_4] : memref<1x128xf32, #tpu.memory_space<vmem>>, vector<1x128xf32>
    %4 = vector.broadcast %3 : vector<1x128xf32> to vector<8x128xf32>
    %5 = arith.addf %2, %4 : vector<8x128xf32>
    %cst_5 = arith.constant 0.000000e+00 : f32
    %6 = vector.broadcast %cst_5 : f32 to vector<8x128xf32>
    %7 = arith.maximumf %5, %6 : vector<8x128xf32>
    %c0_6 = arith.constant 0 : index
    %c0_7 = arith.constant 0 : index
    %8 = vector.load %arg4[%c0_6, %c0_7] : memref<128x64xf32, #tpu.memory_space<vmem>>, vector<128x64xf32>
    %cst_8 = arith.constant dense<0.000000e+00> : vector<8x64xf32>
    %9 = tpu.matmul %7, %8, %cst_8 {dimension_numbers = #tpu.dot_dimension_numbers<[1], [0], [0], [1], [0, 0, 1, 1], [], []>, precision = #tpu.contract_precision<fp32>} : vector<8x128xf32>, vector<128x64xf32>, vector<8x64xf32> -> vector<8x64xf32>
    %c0_9 = arith.constant 0 : index
    %c0_10 = arith.constant 0 : index
    %10 = vector.load %arg5[%c0_9, %c0_10] : memref<1x64xf32, #tpu.memory_space<vmem>>, vector<1x64xf32>
    %11 = vector.broadcast %10 : vector<1x64xf32> to vector<8x64xf32>
    %12 = arith.addf %9, %11 : vector<8x64xf32>
    %cst_11 = arith.constant 0.000000e+00 : f32
    %13 = vector.broadcast %cst_11 : f32 to vector<8x64xf32>
    %14 = arith.maximumf %12, %13 : vector<8x64xf32>
    %c0_12 = arith.constant 0 : index
    %c0_13 = arith.constant 0 : index
    %15 = vector.load %arg6[%c0_12, %c0_13] : memref<64x128xf32, #tpu.memory_space<vmem>>, vector<64x128xf32>
    %cst_14 = arith.constant dense<0.000000e+00> : vector<8x128xf32>
    %16 = tpu.matmul %14, %15, %cst_14 {dimension_numbers = #tpu.dot_dimension_numbers<[1], [0], [0], [1], [0, 0, 1, 1], [], []>, precision = #tpu.contract_precision<fp32>} : vector<8x64xf32>, vector<64x128xf32>, vector<8x128xf32> -> vector<8x128xf32>
    %c0_15 = arith.constant 0 : index
    %c0_16 = arith.constant 0 : index
    %17 = vector.load %arg7[%c0_15, %c0_16] : memref<1x128xf32, #tpu.memory_space<vmem>>, vector<1x128xf32>
    %18 = vector.broadcast %17 : vector<1x128xf32> to vector<8x128xf32>
    %19 = arith.addf %16, %18 : vector<8x128xf32>
    %c0_17 = arith.constant 0 : index
    %c0_18 = arith.constant 0 : index
    %20 = vector.load %arg8[%c0_17, %c0_18] : memref<8x128xf32, #tpu.memory_space<vmem>>, vector<8x128xf32>
    tpu.vector_store %arg8[%c0_17, %c0_18], %19 {strides = array<i32>} : memref<8x128xf32, #tpu.memory_space<vmem>>, vector<8x128xf32>,
    return
  }
  func.func @transform_0(%arg0: i32) -> (i32, i32) {
    %c0_i32 = arith.constant 0 : i32
    %c0_i32_0 = arith.constant 0 : i32
    return %arg0, %c0_i32 : i32, i32
  }
  func.func @transform_1(%arg0: i32) -> (i32, i32) {
    %c0_i32 = arith.constant 0 : i32
    %c0_i32_0 = arith.constant 0 : i32
    %c0_i32_1 = arith.constant 0 : i32
    return %c0_i32, %c0_i32_0 : i32, i32
  }
  func.func @transform_2(%arg0: i32) -> (i32, i32) {
    %c0_i32 = arith.constant 0 : i32
    %c0_i32_0 = arith.constant 0 : i32
    %c0_i32_1 = arith.constant 0 : i32
    return %c0_i32, %c0_i32_0 : i32, i32
  }
  func.func @transform_3(%arg0: i32) -> (i32, i32) {
    %c0_i32 = arith.constant 0 : i32
    %c0_i32_0 = arith.constant 0 : i32
    %c0_i32_1 = arith.constant 0 : i32
    return %c0_i32, %c0_i32_0 : i32, i32
  }
  func.func @transform_4(%arg0: i32) -> (i32, i32) {
    %c0_i32 = arith.constant 0 : i32
    %c0_i32_0 = arith.constant 0 : i32
    %c0_i32_1 = arith.constant 0 : i32
    return %c0_i32, %c0_i32_0 : i32, i32
  }
  func.func @transform_5(%arg0: i32) -> (i32, i32) {
    %c0_i32 = arith.constant 0 : i32
    %c0_i32_0 = arith.constant 0 : i32
    %c0_i32_1 = arith.constant 0 : i32
    return %c0_i32, %c0_i32_0 : i32, i32
  }
  func.func @transform_6(%arg0: i32) -> (i32, i32) {
    %c0_i32 = arith.constant 0 : i32
    %c0_i32_0 = arith.constant 0 : i32
    %c0_i32_1 = arith.constant 0 : i32
    return %c0_i32, %c0_i32_0 : i32, i32
  }
  func.func @transform_7(%arg0: i32) -> (i32, i32) {
    %c0_i32 = arith.constant 0 : i32
    %c0_i32_0 = arith.constant 0 : i32
    return %arg0, %c0_i32 : i32, i32
  }
}

</mosaic_0001>

<llo_original>
// kernel: tpu_custom_call.1
$region0: #{tpu_custom_call.1}
  #allocation0 [shape = 'u32[]', space=smem, size = 0x4, offset = 0x4, fixed_abs, tag = 'smem constant byte address 0x4 - core index']
  #allocation1 [shape = 'u32[72,128]{1,0:T(1,128)}', space=vmem, size = 0x9000, scoped, tag = 'internal scratch']
  %s0 = inlined_call_operand.vmem [shape: f32[8,784], index: 0, kind: input, shape index: {}]
  %s1 = inlined_call_operand.hbm [shape: f32[784,128], index: 1, kind: input, shape index: {}]
  %s2 = inlined_call_operand.vmem [shape: f32[1,128], index: 2, kind: input, shape index: {}]
  %s3 = inlined_call_operand.vmem [shape: f32[128,64], index: 3, kind: input, shape index: {}]
  %s4 = inlined_call_operand.vmem [shape: f32[1,64], index: 4, kind: input, shape index: {}]
  %s5 = inlined_call_operand.vmem [shape: f32[64,128], index: 5, kind: input, shape index: {}]
  %s6 = inlined_call_operand.vmem [shape: f32[1,128], index: 6, kind: input, shape index: {}]
  %s7 = inlined_call_operand.hbm [shape: f32[8,128], index: 7, kind: output, shape index: {}]
  %s8 = sld [smem:[#allocation0]]
  $region42: #{tpu_custom_call.1} parent=0
    _
  %s10 = ssub.s32 1, %s8
  %s11 = scalar_select 0, %s10, %s8
  $region1: #{tpu_custom_call.1} parent=0
    #allocation2 [shape = 'u8[401408]{0}', space=vmem, size = 0x62000, scoped, tag = 'input window, operand 1, single buffered']
    #allocation3 [shape = 's32[1]{0}', space=sflag, size = 0x4, scoped, tag = 'scoped memory for tpu_custom_call.1']
    #allocation4 [shape = 's32[1]{0}', space=sflag, size = 0x4, scoped, tag = 'scoped memory for tpu_custom_call.1']
    #allocation5 [shape = 'u8[4096]{0}', space=vmem, size = 0x1000, scoped, tag = 'output window, operand 0, single buffered']
    %12 = vsyncpa [#allocation3], 0
    %13 = vsyncpa [#allocation4], 0
    // Predicated region
    $region2: #{tpu_custom_call.1} parent=1 // pred_check
      _
    $region3: #{tpu_custom_call.1} parent=1 // pred_check_branch
      %15 = sbr.rel (0) target = $region5
    $region4: #{tpu_custom_call.1} parent=1 // pred_region
      _
    $region5: #{tpu_custom_call.1} parent=1 // pred_fallthru
      _
    // Predicated region
    $region6: #{tpu_custom_call.1} parent=1 // pred_check
      _
    $region7: #{tpu_custom_call.1} parent=1 // pred_check_branch
      %17 = sbr.rel (0) target = $region9
    $region8: #{tpu_custom_call.1} parent=1 // pred_region
      %19 = vsyncadd [#allocation3], 0
      %s20 = sshll.u32 %s1, 4
      %s21 = int_to_ptr.hbm [resolvable:$true] %s20
      %s22 = sshll.u32 [#allocation2], 4
      %s23 = int_to_ptr.vmem [resolvable:$true] %s22
      %28 = dma.hbm_to_vmem [thread:$0]  %s21, 12544, %s23, [#allocation3], 128, 128, 8
    $region9: #{tpu_custom_call.1} parent=1 // pred_fallthru
      _
    // Predicated region
    $region10: #{tpu_custom_call.1} parent=1 // pred_check
      _
    $region11: #{tpu_custom_call.1} parent=1 // pred_check_branch
      %30 = sbr.rel (0) target = $region13
    $region12: #{tpu_custom_call.1} parent=1 // pred_region
      _
    $region13: #{tpu_custom_call.1} parent=1 // pred_fallthru
      _
    // Predicated region
    $region14: #{tpu_custom_call.1} parent=1 // pred_check
      _
    $region15: #{tpu_custom_call.1} parent=1 // pred_check_branch
      %32 = sbr.rel (0) target = $region17
    $region16: #{tpu_custom_call.1} parent=1 // pred_region
      _
    $region17: #{tpu_custom_call.1} parent=1 // pred_fallthru
      _
    // Predicated region
    $region18: #{tpu_custom_call.1} parent=1 // pred_check
      _
    $region19: #{tpu_custom_call.1} parent=1 // pred_check_branch
      %34 = sbr.rel (0) target = $region21
    $region20: #{tpu_custom_call.1} parent=1 // pred_region
      _
    $region21: #{tpu_custom_call.1} parent=1 // pred_fallthru
      _
    // Predicated region
    $region22: #{tpu_custom_call.1} parent=1 // pred_check
      _
    $region23: #{tpu_custom_call.1} parent=1 // pred_check_branch
      %36 = sbr.rel (0) target = $region25
    $region24: #{tpu_custom_call.1} parent=1 // pred_region
      _
    $region25: #{tpu_custom_call.1} parent=1 // pred_fallthru
      _
    // Predicated region
    $region26: #{tpu_custom_call.1} parent=1 // pred_check
      _
    $region27: #{tpu_custom_call.1} parent=1 // pred_check_branch
      %38 = sbr.rel (0) target = $region29
    $region28: #{tpu_custom_call.1} parent=1 // pred_region
      _
    $region29: #{tpu_custom_call.1} parent=1 // pred_fallthru
      _
    // Predicated region
    $region30: #{tpu_custom_call.1} parent=1 // pred_check
      _
    $region31: #{tpu_custom_call.1} parent=1 // pred_check_branch
      %40 = sbr.rel (0) target = $region33
    $region32: #{tpu_custom_call.1} parent=1 // pred_region
      %42 = dma.done [#allocation3], 12544
    $region33: #{tpu_custom_call.1} parent=1 // pred_fallthru
      _
    %v43 = vld [vmem:[%s0] sm:$0xff]
    %v44 = vld [vmem:[%s0 + $0x8] sm:$0xff]
    %v45 = vld [vmem:[%s0 + $0x10] sm:$0xff]
    %v46 = vld [vmem:[%s0 + $0x18] sm:$0xff]
    %v47 = vld [vmem:[%s0 + $0x20] sm:$0xff]
    %v48 = vld [vmem:[%s0 + $0x28] sm:$0xff]
    %v49 = vld [vmem:[%s0 + $0x30] sm:$0xff]
    %v50 = vld [vmem:[#allocation2] sm:$0xff]
    %v51 = vld [vmem:[#allocation2 + $0x8] sm:$0xff]
    %v52 = vld [vmem:[#allocation2 + $0x10] sm:$0xff]
    %v53 = vld [vmem:[#allocation2 + $0x18] sm:$0xff]
    %v54 = vld [vmem:[#allocation2 + $0x20] sm:$0xff]
    %v55 = vld [vmem:[#allocation2 + $0x28] sm:$0xff]
    %v56 = vld [vmem:[#allocation2 + $0x30] sm:$0xff]
    %v57 = vld [vmem:[#allocation2 + $0x38] sm:$0xff]
    %v58 = vld [vmem:[#allocation2 + $0x40] sm:$0xff]
    %v59 = vld [vmem:[#allocation2 + $0x48] sm:$0xff]
    %v60 = vld [vmem:[#allocation2 + $0x50] sm:$0xff]
    %v61 = vld [vmem:[#allocation2 + $0x58] sm:$0xff]
    %v62 = vld [vmem:[#allocation2 + $0x60] sm:$0xff]
    %v63 = vld [vmem:[#allocation2 + $0x68] sm:$0xff]
    %v64 = vld [vmem:[#allocation2 + $0x70] sm:$0xff]
    %v65 = vld [vmem:[#allocation2 + $0x78] sm:$0xff]
    %v66 = vld [vmem:[#allocation2 + $0x80] sm:$0xff]
    %v67 = vld [vmem:[#allocation2 + $0x88] sm:$0xff]
    %v68 = vld [vmem:[#allocation2 + $0x90] sm:$0xff]
    %v69 = vld [vmem:[#allocation2 + $0x98] sm:$0xff]
    %v70 = vld [vmem:[#allocation2 + $0xa0] sm:$0xff]
    %v71 = vld [vmem:[#allocation2 + $0xa8] sm:$0xff]
    %v72 = vld [vmem:[#allocation2 + $0xb0] sm:$0xff]
    %v73 = vld [vmem:[#allocation2 + $0xb8] sm:$0xff]
    %v74 = vld [vmem:[#allocation2 + $0xc0] sm:$0xff]
    %v75 = vld [vmem:[#allocation2 + $0xc8] sm:$0xff]
    %v76 = vld [vmem:[#allocation2 + $0xd0] sm:$0xff]
    %v77 = vld [vmem:[#allocation2 + $0xd8] sm:$0xff]
    %v78 = vld [vmem:[#allocation2 + $0xe0] sm:$0xff]
    %v79 = vld [vmem:[#allocation2 + $0xe8] sm:$0xff]
    %v80 = vld [vmem:[#allocation2 + $0xf0] sm:$0xff]
    %v81 = vld [vmem:[#allocation2 + $0xf8] sm:$0xff]
    %v82 = vld [vmem:[#allocation2 + $0x100] sm:$0xff]
    %v83 = vld [vmem:[#allocation2 + $0x108] sm:$0xff]
    %v84 = vld [vmem:[#allocation2 + $0x110] sm:$0xff]
    %v85 = vld [vmem:[#allocation2 + $0x118] sm:$0xff]
    %v86 = vld [vmem:[#allocation2 + $0x120] sm:$0xff]
    %v87 = vld [vmem:[#allocation2 + $0x128] sm:$0xff]
    %v88 = vld [vmem:[#allocation2 + $0x130] sm:$0xff]
    %v89 = vld [vmem:[#allocation2 + $0x138] sm:$0xff]
    %v90 = vld [vmem:[#allocation2 + $0x140] sm:$0xff]
    %v91 = vld [vmem:[#allocation2 + $0x148] sm:$0xff]
    %v92 = vld [vmem:[#allocation2 + $0x150] sm:$0xff]
    %v93 = vld [vmem:[#allocation2 + $0x158] sm:$0xff]
    %v94 = vld [vmem:[#allocation2 + $0x160] sm:$0xff]
    %v95 = vld [vmem:[#allocation2 + $0x168] sm:$0xff]
    %v96 = vld [vmem:[#allocation2 + $0x170] sm:$0xff]
    %v97 = vld [vmem:[#allocation2 + $0x178] sm:$0xff]
    %v98 = vld [vmem:[#allocation2 + $0x180] sm:$0xff]
    %v99 = vld [vmem:[#allocation2 + $0x188] sm:$0xff]
    %v100 = vld [vmem:[#allocation2 + $0x190] sm:$0xff]
    %v101 = vld [vmem:[#allocation2 + $0x198] sm:$0xff]
    %v102 = vld [vmem:[#allocation2 + $0x1a0] sm:$0xff]
    %v103 = vld [vmem:[#allocation2 + $0x1a8] sm:$0xff]
    %v104 = vld [vmem:[#allocation2 + $0x1b0] sm:$0xff]
    %v105 = vld [vmem:[#allocation2 + $0x1b8] sm:$0xff]
    %v106 = vld [vmem:[#allocation2 + $0x1c0] sm:$0xff]
    %v107 = vld [vmem:[#allocation2 + $0x1c8] sm:$0xff]
    %v108 = vld [vmem:[#allocation2 + $0x1d0] sm:$0xff]
    %v109 = vld [vmem:[#allocation2 + $0x1d8] sm:$0xff]
    %v110 = vld [vmem:[#allocation2 + $0x1e0] sm:$0xff]
    %v111 = vld [vmem:[#allocation2 + $0x1e8] sm:$0xff]
    %v112 = vld [vmem:[#allocation2 + $0x1f0] sm:$0xff]
    %v113 = vld [vmem:[#allocation2 + $0x1f8] sm:$0xff]
    %v114 = vld [vmem:[#allocation2 + $0x200] sm:$0xff]
    %v115 = vld [vmem:[#allocation2 + $0x208] sm:$0xff]
    %v116 = vld [vmem:[#allocation2 + $0x210] sm:$0xff]
    %v117 = vld [vmem:[#allocation2 + $0x218] sm:$0xff]
    %v118 = vld [vmem:[#allocation2 + $0x220] sm:$0xff]
    %v119 = vld [vmem:[#allocation2 + $0x228] sm:$0xff]
    %v120 = vld [vmem:[#allocation2 + $0x230] sm:$0xff]
    %v121 = vld [vmem:[#allocation2 + $0x238] sm:$0xff]
    %v122 = vld [vmem:[#allocation2 + $0x240] sm:$0xff]
    %v123 = vld [vmem:[#allocation2 + $0x248] sm:$0xff]
    %v124 = vld [vmem:[#allocation2 + $0x250] sm:$0xff]
    %v125 = vld [vmem:[#allocation2 + $0x258] sm:$0xff]
    %v126 = vld [vmem:[#allocation2 + $0x260] sm:$0xff]
    %v127 = vld [vmem:[#allocation2 + $0x268] sm:$0xff]
    %v128 = vld [vmem:[#allocation2 + $0x270] sm:$0xff]
    %v129 = vld [vmem:[#allocation2 + $0x278] sm:$0xff]
    %v130 = vld [vmem:[#allocation2 + $0x280] sm:$0xff]
    %v131 = vld [vmem:[#allocation2 + $0x288] sm:$0xff]
    %v132 = vld [vmem:[#allocation2 + $0x290] sm:$0xff]
    %v133 = vld [vmem:[#allocation2 + $0x298] sm:$0xff]
    %v134 = vld [vmem:[#allocation2 + $0x2a0] sm:$0xff]
    %v135 = vld [vmem:[#allocation2 + $0x2a8] sm:$0xff]
    %v136 = vld [vmem:[#allocation2 + $0x2b0] sm:$0xff]
    %v137 = vld [vmem:[#allocation2 + $0x2b8] sm:$0xff]
    %v138 = vld [vmem:[#allocation2 + $0x2c0] sm:$0xff]
    %v139 = vld [vmem:[#allocation2 + $0x2c8] sm:$0xff]
    %v140 = vld [vmem:[#allocation2 + $0x2d0] sm:$0xff]
    %v141 = vld [vmem:[#allocation2 + $0x2d8] sm:$0xff]
    %v142 = vld [vmem:[#allocation2 + $0x2e0] sm:$0xff]
    %v143 = vld [vmem:[#allocation2 + $0x2e8] sm:$0xff]
    %v144 = vld [vmem:[#allocation2 + $0x2f0] sm:$0xff]
    %v145 = vld [vmem:[#allocation2 + $0x2f8] sm:$0xff]
    %v146 = vld [vmem:[#allocation2 + $0x300] sm:$0xff]
    %v147 = vld [vmem:[#allocation2 + $0x308] sm:$0xff]
    %v148 = vld [vmem:[%s2] sm:$0x1]
    %v150 = vperm.slane %v148, 0
    %vm152 = vcmask 130048
    %v154 = vsel %vm152, %v49, 0
    %v156 = vand.u32 %v65, 4294901760
    %157 = vmatpush.msra.mxu0 %v156
    %v158 = vand.u32 %v64, 4294901760
    %159 = vmatpush.msra.mxu0 %v158
    %v160 = vand.u32 %v63, 4294901760
    %161 = vmatpush.msra.mxu0 %v160
    %v162 = vand.u32 %v62, 4294901760
    %163 = vmatpush.msra.mxu0 %v162
    %v164 = vand.u32 %v61, 4294901760
    %165 = vmatpush.msra.mxu0 %v164
    %v166 = vand.u32 %v60, 4294901760
    %167 = vmatpush.msra.mxu0 %v166
    %v168 = vand.u32 %v59, 4294901760
    %169 = vmatpush.msra.mxu0 %v168
    %v170 = vand.u32 %v58, 4294901760
    %171 = vmatpush.msra.mxu0 %v170
    %v172 = vand.u32 %v57, 4294901760
    %173 = vmatpush.msra.mxu0 %v172
    %v174 = vand.u32 %v56, 4294901760
    %175 = vmatpush.msra.mxu0 %v174
    %v176 = vand.u32 %v55, 4294901760
    %177 = vmatpush.msra.mxu0 %v176
    %v178 = vand.u32 %v54, 4294901760
    %179 = vmatpush.msra.mxu0 %v178
    %v180 = vand.u32 %v53, 4294901760
    %181 = vmatpush.msra.mxu0 %v180
    %v182 = vand.u32 %v52, 4294901760
    %183 = vmatpush.msra.mxu0 %v182
    %v184 = vand.u32 %v51, 4294901760
    %185 = vmatpush.msra.mxu0 %v184
    %v186 = vand.u32 %v50, 4294901760
    %187 = vmatpush.msra.mxu0 %v186
    %v188 = vand.u32 %v43, 4294901760
    %v189 = vsub.f32 %v43, %v188
    %v190 = vand.u32 %v189, 4294901760
    %v191 = vsub.f32 %v189, %v190
    %v192 = vand.u32 %v191, 4294901760
    %193 = vmatmul.f32.gmra.mxu0 %v192
    %v194 = vpop.f32.mrf.mxu0
    %v195 = vadd.f32 %v150, %v194
    %196 = vdwg.mxu0
    %v197 = vand.u32 %v65, 4294901760
    %v198 = vsub.f32 %v65, %v197
    %v199 = vand.u32 %v198, 4294901760
    %v200 = vsub.f32 %v198, %v199
    %v201 = vand.u32 %v200, 4294901760
    %202 = vmatpush.msra.mxu0 %v201
    %v203 = vand.u32 %v64, 4294901760
    %v204 = vsub.f32 %v64, %v203
    %v205 = vand.u32 %v204, 4294901760
    %v206 = vsub.f32 %v204, %v205
    %v207 = vand.u32 %v206, 4294901760
    %208 = vmatpush.msra.mxu0 %v207
    %v209 = vand.u32 %v63, 4294901760
    %v210 = vsub.f32 %v63, %v209
    %v211 = vand.u32 %v210, 4294901760
    %v212 = vsub.f32 %v210, %v211
    %v213 = vand.u32 %v212, 4294901760
    %214 = vmatpush.msra.mxu0 %v213
    %v215 = vand.u32 %v62, 4294901760
    %v216 = vsub.f32 %v62, %v215
    %v217 = vand.u32 %v216, 4294901760
    %v218 = vsub.f32 %v216, %v217
    %v219 = vand.u32 %v218, 4294901760
    %220 = vmatpush.msra.mxu0 %v219
    %v221 = vand.u32 %v61, 4294901760
    %v222 = vsub.f32 %v61, %v221
    %v223 = vand.u32 %v222, 4294901760
    %v224 = vsub.f32 %v222, %v223
    %v225 = vand.u32 %v224, 4294901760
    %226 = vmatpush.msra.mxu0 %v225
    %v227 = vand.u32 %v60, 4294901760
    %v228 = vsub.f32 %v60, %v227
    %v229 = vand.u32 %v228, 4294901760
    %v230 = vsub.f32 %v228, %v229
    %v231 = vand.u32 %v230, 4294901760
    %232 = vmatpush.msra.mxu0 %v231
    %v233 = vand.u32 %v59, 4294901760
    %v234 = vsub.f32 %v59, %v233
    %v235 = vand.u32 %v234, 4294901760
    %v236 = vsub.f32 %v234, %v235
    %v237 = vand.u32 %v236, 4294901760
    %238 = vmatpush.msra.mxu0 %v237
    %v239 = vand.u32 %v58, 4294901760
    %v240 = vsub.f32 %v58, %v239
    %v241 = vand.u32 %v240, 4294901760
    %v242 = vsub.f32 %v240, %v241
    %v243 = vand.u32 %v242, 4294901760
    %244 = vmatpush.msra.mxu0 %v243
    %v245 = vand.u32 %v57, 4294901760
    %v246 = vsub.f32 %v57, %v245
    %v247 = vand.u32 %v246, 4294901760
    %v248 = vsub.f32 %v246, %v247
    %v249 = vand.u32 %v248, 4294901760
    %250 = vmatpush.msra.mxu0 %v249
    %v251 = vand.u32 %v56, 4294901760
    %v252 = vsub.f32 %v56, %v251
    %v253 = vand.u32 %v252, 4294901760
    %v254 = vsub.f32 %v252, %v253
    %v255 = vand.u32 %v254, 4294901760
    %256 = vmatpush.msra.mxu0 %v255
    %v257 = vand.u32 %v55, 4294901760
    %v258 = vsub.f32 %v55, %v257
    %v259 = vand.u32 %v258, 4294901760
    %v260 = vsub.f32 %v258, %v259
    %v261 = vand.u32 %v260, 4294901760
    %262 = vmatpush.msra.mxu0 %v261
    %v263 = vand.u32 %v54, 4294901760
    %v264 = vsub.f32 %v54, %v263
    %v265 = vand.u32 %v264, 4294901760
    %v266 = vsub.f32 %v264, %v265
    %v267 = vand.u32 %v266, 4294901760
    %268 = vmatpush.msra.mxu0 %v267
    %v269 = vand.u32 %v53, 4294901760
    %v270 = vsub.f32 %v53, %v269
    %v271 = vand.u32 %v270, 4294901760
    %v272 = vsub.f32 %v270, %v271
    %v273 = vand.u32 %v272, 4294901760
    %274 = vmatpush.msra.mxu0 %v273
    %v275 = vand.u32 %v52, 4294901760
    %v276 = vsub.f32 %v52, %v275
    %v277 = vand.u32 %v276, 4294901760
    %v278 = vsub.f32 %v276, %v277
    %v279 = vand.u32 %v278, 4294901760
    %280 = vmatpush.msra.mxu0 %v279
    %v281 = vand.u32 %v51, 4294901760
    %v282 = vsub.f32 %v51, %v281
    %v283 = vand.u32 %v282, 4294901760
    %v284 = vsub.f32 %v282, %v283
    %v285 = vand.u32 %v284, 4294901760
    %286 = vmatpush.msra.mxu0 %v285
    %v287 = vand.u32 %v50, 4294901760
    %v288 = vsub.f32 %v50, %v287
    %v289 = vand.u32 %v288, 4294901760
    %v290 = vsub.f32 %v288, %v289
    %v291 = vand.u32 %v290, 4294901760
    %292 = vmatpush.msra.mxu0 %v291
    %v293 = vand.u32 %v43, 4294901760
    %294 = vmatmul.f32.gmra.mxu0 %v293
    %v295 = vpop.f32.mrf.mxu0
    %v296 = vadd.f32 %v195, %v295
    %297 = vdwg.mxu0
    %v298 = vand.u32 %v65, 4294901760
    %v299 = vsub.f32 %v65, %v298
    %300 = vmatpush.msra.mxu0 %v299
    %v301 = vand.u32 %v64, 4294901760
    %v302 = vsub.f32 %v64, %v301
    %303 = vmatpush.msra.mxu0 %v302
    %v304 = vand.u32 %v63, 4294901760
    %v305 = vsub.f32 %v63, %v304
    %306 = vmatpush.msra.mxu0 %v305
    %v307 = vand.u32 %v62, 4294901760
    %v308 = vsub.f32 %v62, %v307
    %309 = vmatpush.msra.mxu0 %v308
    %v310 = vand.u32 %v61, 4294901760
    %v311 = vsub.f32 %v61, %v310
    %312 = vmatpush.msra.mxu0 %v311
    %v313 = vand.u32 %v60, 4294901760
    %v314 = vsub.f32 %v60, %v313
    %315 = vmatpush.msra.mxu0 %v314
    %v316 = vand.u32 %v59, 4294901760
    %v317 = vsub.f32 %v59, %v316
    %318 = vmatpush.msra.mxu0 %v317
    %v319 = vand.u32 %v58, 4294901760
    %v320 = vsub.f32 %v58, %v319
    %321 = vmatpush.msra.mxu0 %v320
    %v322 = vand.u32 %v57, 4294901760
    %v323 = vsub.f32 %v57, %v322
    %324 = vmatpush.msra.mxu0 %v323
    %v325 = vand.u32 %v56, 4294901760
    %v326 = vsub.f32 %v56, %v325
    %327 = vmatpush.msra.mxu0 %v326
    %v328 = vand.u32 %v55, 4294901760
    %v329 = vsub.f32 %v55, %v328
    %330 = vmatpush.msra.mxu0 %v329
    %v331 = vand.u32 %v54, 4294901760
    %v332 = vsub.f32 %v54, %v331
    %333 = vmatpush.msra.mxu0 %v332
    %v334 = vand.u32 %v53, 4294901760
    %v335 = vsub.f32 %v53, %v334
    %336 = vmatpush.msra.mxu0 %v335
    %v337 = vand.u32 %v52, 4294901760
    %v338 = vsub.f32 %v52, %v337
    %339 = vmatpush.msra.mxu0 %v338
    %v340 = vand.u32 %v51, 4294901760
    %v341 = vsub.f32 %v51, %v340
    %342 = vmatpush.msra.mxu0 %v341
    %v343 = vand.u32 %v50, 4294901760
    %v344 = vsub.f32 %v50, %v343
    %345 = vmatpush.msra.mxu0 %v344
    %v346 = vand.u32 %v43, 4294901760
    %v347 = vsub.f32 %v43, %v346
    %348 = vmatmul.f32.gmra.mxu0 %v347
    %v349 = vpop.f32.mrf.mxu0
    %v350 = vadd.f32 %v296, %v349
    %351 = vdwg.mxu0
    %v352 = vand.u32 %v65, 4294901760
    %353 = vmatpush.msra.mxu0 %v352
    %v354 = vand.u32 %v64, 4294901760
    %355 = vmatpush.msra.mxu0 %v354
    %v356 = vand.u32 %v63, 4294901760
    %357 = vmatpush.msra.mxu0 %v356
    %v358 = vand.u32 %v62, 4294901760
    %359 = vmatpush.msra.mxu0 %v358
    %v360 = vand.u32 %v61, 4294901760
    %361 = vmatpush.msra.mxu0 %v360
    %v362 = vand.u32 %v60, 4294901760
    %363 = vmatpush.msra.mxu0 %v362
    %v364 = vand.u32 %v59, 4294901760
    %365 = vmatpush.msra.mxu0 %v364
    %v366 = vand.u32 %v58, 4294901760
    %367 = vmatpush.msra.mxu0 %v366
    %v368 = vand.u32 %v57, 4294901760
    %369 = vmatpush.msra.mxu0 %v368
    %v370 = vand.u32 %v56, 4294901760
    %371 = vmatpush.msra.mxu0 %v370
    %v372 = vand.u32 %v55, 4294901760
    %373 = vmatpush.msra.mxu0 %v372
    %v374 = vand.u32 %v54, 4294901760
    %375 = vmatpush.msra.mxu0 %v374
    %v376 = vand.u32 %v53, 4294901760
    %377 = vmatpush.msra.mxu0 %v376
    %v378 = vand.u32 %v52, 4294901760
    %379 = vmatpush.msra.mxu0 %v378
    %v380 = vand.u32 %v51, 4294901760
    %381 = vmatpush.msra.mxu0 %v380
    %v382 = vand.u32 %v50, 4294901760
    %383 = vmatpush.msra.mxu0 %v382
    %v384 = vand.u32 %v43, 4294901760
    %v385 = vsub.f32 %v43, %v384
    %v386 = vand.u32 %v385, 4294901760
    %387 = vmatmul.f32.gmra.mxu0 %v386
    %v388 = vpop.f32.mrf.mxu0
    %v389 = vadd.f32 %v350, %v388
    %390 = vdwg.mxu0
    %v391 = vand.u32 %v65, 4294901760
    %v392 = vsub.f32 %v65, %v391
    %v393 = vand.u32 %v392, 4294901760
    %394 = vmatpush.msra.mxu0 %v393
    %v395 = vand.u32 %v64, 4294901760
    %v396 = vsub.f32 %v64, %v395
    %v397 = vand.u32 %v396, 4294901760
    %398 = vmatpush.msra.mxu0 %v397
    %v399 = vand.u32 %v63, 4294901760
    %v400 = vsub.f32 %v63, %v399
    %v401 = vand.u32 %v400, 4294901760
    %402 = vmatpush.msra.mxu0 %v401
    %v403 = vand.u32 %v62, 4294901760
    %v404 = vsub.f32 %v62, %v403
    %v405 = vand.u32 %v404, 4294901760
    %406 = vmatpush.msra.mxu0 %v405
    %v407 = vand.u32 %v61, 4294901760
    %v408 = vsub.f32 %v61, %v407
    %v409 = vand.u32 %v408, 4294901760
    %410 = vmatpush.msra.mxu0 %v409
    %v411 = vand.u32 %v60, 4294901760
    %v412 = vsub.f32 %v60, %v411
    %v413 = vand.u32 %v412, 4294901760
    %414 = vmatpush.msra.mxu0 %v413
    %v415 = vand.u32 %v59, 4294901760
    %v416 = vsub.f32 %v59, %v415
    %v417 = vand.u32 %v416, 4294901760
    %418 = vmatpush.msra.mxu0 %v417
    %v419 = vand.u32 %v58, 4294901760
    %v420 = vsub.f32 %v58, %v419
    %v421 = vand.u32 %v420, 4294901760
    %422 = vmatpush.msra.mxu0 %v421
    %v423 = vand.u32 %v57, 4294901760
    %v424 = vsub.f32 %v57, %v423
    %v425 = vand.u32 %v424, 4294901760
    %426 = vmatpush.msra.mxu0 %v425
    %v427 = vand.u32 %v56, 4294901760
    %v428 = vsub.f32 %v56, %v427
    %v429 = vand.u32 %v428, 4294901760
    %430 = vmatpush.msra.mxu0 %v429
    %v431 = vand.u32 %v55, 4294901760
    %v432 = vsub.f32 %v55, %v431
    %v433 = vand.u32 %v432, 4294901760
    %434 = vmatpush.msra.mxu0 %v433
    %v435 = vand.u32 %v54, 4294901760
    %v436 = vsub.f32 %v54, %v435
    %v437 = vand.u32 %v436, 4294901760
    %438 = vmatpush.msra.mxu0 %v437
    %v439 = vand.u32 %v53, 4294901760
    %v440 = vsub.f32 %v53, %v439
    %v441 = vand.u32 %v440, 4294901760
    %442 = vmatpush.msra.mxu0 %v441
    %v443 = vand.u32 %v52, 4294901760
    %v444 = vsub.f32 %v52, %v443
    %v445 = vand.u32 %v444, 4294901760
    %446 = vmatpush.msra.mxu0 %v445
    %v447 = vand.u32 %v51, 4294901760
    %v448 = vsub.f32 %v51, %v447
    %v449 = vand.u32 %v448, 4294901760
    %450 = vmatpush.msra.mxu0 %v449
    %v451 = vand.u32 %v50, 4294901760
    %v452 = vsub.f32 %v50, %v451
    %v453 = vand.u32 %v452, 4294901760
    %454 = vmatpush.msra.mxu0 %v453
    %v455 = vand.u32 %v43, 4294901760
    %456 = vmatmul.f32.gmra.mxu0 %v455
    %v457 = vpop.f32.mrf.mxu0
    %v458 = vadd.f32 %v389, %v457
    %459 = vdwg.mxu0
    %v460 = vand.u32 %v65, 4294901760
    %461 = vmatpush.msra.mxu0 %v460
    %v462 = vand.u32 %v64, 4294901760
    %463 = vmatpush.msra.mxu0 %v462
    %v464 = vand.u32 %v63, 4294901760
    %465 = vmatpush.msra.mxu0 %v464
    %v466 = vand.u32 %v62, 4294901760
    %467 = vmatpush.msra.mxu0 %v466
    %v468 = vand.u32 %v61, 4294901760
    %469 = vmatpush.msra.mxu0 %v468
    %v470 = vand.u32 %v60, 4294901760
    %471 = vmatpush.msra.mxu0 %v470
    %v472 = vand.u32 %v59, 4294901760
    %473 = vmatpush.msra.mxu0 %v472
    %v474 = vand.u32 %v58, 4294901760
    %475 = vmatpush.msra.mxu0 %v474
    %v476 = vand.u32 %v57, 4294901760
    %477 = vmatpush.msra.mxu0 %v476
    %v478 = vand.u32 %v56, 4294901760
    %479 = vmatpush.msra.mxu0 %v478
    %v480 = vand.u32 %v55, 4294901760
    %481 = vmatpush.msra.mxu0 %v480
    %v482 = vand.u32 %v54, 4294901760
    %483 = vmatpush.msra.mxu0 %v482
    %v484 = vand.u32 %v53, 4294901760
    %485 = vmatpush.msra.mxu0 %v484
    %v486 = vand.u32 %v52, 4294901760
    %487 = vmatpush.msra.mxu0 %v486
    %v488 = vand.u32 %v51, 4294901760
    %489 = vmatpush.msra.mxu0 %v488
    %v490 = vand.u32 %v50, 4294901760
    %491 = vmatpush.msra.mxu0 %v490
    %v492 = vand.u32 %v43, 4294901760
    %493 = vmatmul.f32.gmra.mxu0 %v492
    %v494 = vpop.f32.mrf.mxu0
    %v495 = vadd.f32 %v458, %v494
    %496 = vdwg.mxu0
    %v497 = vand.u32 %v81, 4294901760
    %498 = vmatpush.msra.mxu0 %v497
    %v499 = vand.u32 %v80, 4294901760
    %500 = vmatpush.msra.mxu0 %v499
    %v501 = vand.u32 %v79, 4294901760
    %502 = vmatpush.msra.mxu0 %v501
    %v503 = vand.u32 %v78, 4294901760
    %504 = vmatpush.msra.mxu0 %v503
    %v505 = vand.u32 %v77, 4294901760
    %506 = vmatpush.msra.mxu0 %v505
    %v507 = vand.u32 %v76, 4294901760
    %508 = vmatpush.msra.mxu0 %v507
    %v509 = vand.u32 %v75, 4294901760
    %510 = vmatpush.msra.mxu0 %v509
    %v511 = vand.u32 %v74, 4294901760
    %512 = vmatpush.msra.mxu0 %v511
    %v513 = vand.u32 %v73, 4294901760
    %514 = vmatpush.msra.mxu0 %v513
    %v515 = vand.u32 %v72, 4294901760
    %516 = vmatpush.msra.mxu0 %v515
    %v517 = vand.u32 %v71, 4294901760
    %518 = vmatpush.msra.mxu0 %v517
    %v519 = vand.u32 %v70, 4294901760
    %520 = vmatpush.msra.mxu0 %v519
    %v521 = vand.u32 %v69, 4294901760
    %522 = vmatpush.msra.mxu0 %v521
    %v523 = vand.u32 %v68, 4294901760
    %524 = vmatpush.msra.mxu0 %v523
    %v525 = vand.u32 %v67, 4294901760
    %526 = vmatpush.msra.mxu0 %v525
    %v527 = vand.u32 %v66, 4294901760
    %528 = vmatpush.msra.mxu0 %v527
    %v529 = vand.u32 %v44, 4294901760
    %v530 = vsub.f32 %v44, %v529
    %v531 = vand.u32 %v530, 4294901760
    %v532 = vsub.f32 %v530, %v531
    %v533 = vand.u32 %v532, 4294901760
    %534 = vmatmul.f32.gmra.mxu0 %v533
    %v535 = vpop.f32.mrf.mxu0
    %v536 = vadd.f32 %v495, %v535
    %537 = vdwg.mxu0
    %v538 = vand.u32 %v81, 4294901760
    %v539 = vsub.f32 %v81, %v538
    %v540 = vand.u32 %v539, 4294901760
    %v541 = vsub.f32 %v539, %v540
    %v542 = vand.u32 %v541, 4294901760
    %543 = vmatpush.msra.mxu0 %v542
    %v544 = vand.u32 %v80, 4294901760
    %v545 = vsub.f32 %v80, %v544
    %v546 = vand.u32 %v545, 4294901760
    %v547 = vsub.f32 %v545, %v546
    %v548 = vand.u32 %v547, 4294901760
    %549 = vmatpush.msra.mxu0 %v548
    %v550 = vand.u32 %v79, 4294901760
    %v551 = vsub.f32 %v79, %v550
    %v552 = vand.u32 %v551, 4294901760
    %v553 = vsub.f32 %v551, %v552
    %v554 = vand.u32 %v553, 4294901760
    %555 = vmatpush.msra.mxu0 %v554
    %v556 = vand.u32 %v78, 4294901760
    %v557 = vsub.f32 %v78, %v556
    %v558 = vand.u32 %v557, 4294901760
    %v559 = vsub.f32 %v557, %v558
    %v560 = vand.u32 %v559, 4294901760
    %561 = vmatpush.msra.mxu0 %v560
    %v562 = vand.u32 %v77, 4294901760
    %v563 = vsub.f32 %v77, %v562
    %v564 = vand.u32 %v563, 4294901760
    %v565 = vsub.f32 %v563, %v564
    %v566 = vand.u32 %v565, 4294901760
    %567 = vmatpush.msra.mxu0 %v566
    %v568 = vand.u32 %v76, 4294901760
    %v569 = vsub.f32 %v76, %v568
    %v570 = vand.u32 %v569, 4294901760
    %v571 = vsub.f32 %v569, %v570
    %v572 = vand.u32 %v571, 4294901760
    %573 = vmatpush.msra.mxu0 %v572
    %v574 = vand.u32 %v75, 4294901760
    %v575 = vsub.f32 %v75, %v574
    %v576 = vand.u32 %v575, 4294901760
    %v577 = vsub.f32 %v575, %v576
    %v578 = vand.u32 %v577, 4294901760
    %579 = vmatpush.msra.mxu0 %v578
    %v580 = vand.u32 %v74, 4294901760
    %v581 = vsub.f32 %v74, %v580
    %v582 = vand.u32 %v581, 4294901760
    %v583 = vsub.f32 %v581, %v582
    %v584 = vand.u32 %v583, 4294901760
    %585 = vmatpush.msra.mxu0 %v584
    %v586 = vand.u32 %v73, 4294901760
    %v587 = vsub.f32 %v73, %v586
    %v588 = vand.u32 %v587, 4294901760
    %v589 = vsub.f32 %v587, %v588
    %v590 = vand.u32 %v589, 4294901760
    %591 = vmatpush.msra.mxu0 %v590
    %v592 = vand.u32 %v72, 4294901760
    %v593 = vsub.f32 %v72, %v592
    %v594 = vand.u32 %v593, 4294901760
    %v595 = vsub.f32 %v593, %v594
    %v596 = vand.u32 %v595, 4294901760
    %597 = vmatpush.msra.mxu0 %v596
    %v598 = vand.u32 %v71, 4294901760
    %v599 = vsub.f32 %v71, %v598
    %v600 = vand.u32 %v599, 4294901760
    %v601 = vsub.f32 %v599, %v600
    %v602 = vand.u32 %v601, 4294901760
    %603 = vmatpush.msra.mxu0 %v602
    %v604 = vand.u32 %v70, 4294901760
    %v605 = vsub.f32 %v70, %v604
    %v606 = vand.u32 %v605, 4294901760
    %v607 = vsub.f32 %v605, %v606
    %v608 = vand.u32 %v607, 4294901760
    %609 = vmatpush.msra.mxu0 %v608
    %v610 = vand.u32 %v69, 4294901760
    %v611 = vsub.f32 %v69, %v610
    %v612 = vand.u32 %v611, 4294901760
    %v613 = vsub.f32 %v611, %v612
    %v614 = vand.u32 %v613, 4294901760
    %615 = vmatpush.msra.mxu0 %v614
    %v616 = vand.u32 %v68, 4294901760
    %v617 = vsub.f32 %v68, %v616
    %v618 = vand.u32 %v617, 4294901760
    %v619 = vsub.f32 %v617, %v618
    %v620 = vand.u32 %v619, 4294901760
    %621 = vmatpush.msra.mxu0 %v620
    %v622 = vand.u32 %v67, 4294901760
    %v623 = vsub.f32 %v67, %v622
    %v624 = vand.u32 %v623, 4294901760
    %v625 = vsub.f32 %v623, %v624
    %v626 = vand.u32 %v625, 4294901760
    %627 = vmatpush.msra.mxu0 %v626
    %v628 = vand.u32 %v66, 4294901760
    %v629 = vsub.f32 %v66, %v628
    %v630 = vand.u32 %v629, 4294901760
    %v631 = vsub.f32 %v629, %v630
    %v632 = vand.u32 %v631, 4294901760
    %633 = vmatpush.msra.mxu0 %v632
    %v634 = vand.u32 %v44, 4294901760
    %635 = vmatmul.f32.gmra.mxu0 %v634
    %v636 = vpop.f32.mrf.mxu0
    %v637 = vadd.f32 %v536, %v636
    %638 = vdwg.mxu0
    %v639 = vand.u32 %v81, 4294901760
    %v640 = vsub.f32 %v81, %v639
    %641 = vmatpush.msra.mxu0 %v640
    %v642 = vand.u32 %v80, 4294901760
    %v643 = vsub.f32 %v80, %v642
    %644 = vmatpush.msra.mxu0 %v643
    %v645 = vand.u32 %v79, 4294901760
    %v646 = vsub.f32 %v79, %v645
    %647 = vmatpush.msra.mxu0 %v646
    %v648 = vand.u32 %v78, 4294901760
    %v649 = vsub.f32 %v78, %v648
    %650 = vmatpush.msra.mxu0 %v649
    %v651 = vand.u32 %v77, 4294901760
    %v652 = vsub.f32 %v77, %v651
    %653 = vmatpush.msra.mxu0 %v652
    %v654 = vand.u32 %v76, 4294901760
    %v655 = vsub.f32 %v76, %v654
    %656 = vmatpush.msra.mxu0 %v655
    %v657 = vand.u32 %v75, 4294901760
    %v658 = vsub.f32 %v75, %v657
    %659 = vmatpush.msra.mxu0 %v658
    %v660 = vand.u32 %v74, 4294901760
    %v661 = vsub.f32 %v74, %v660
    %662 = vmatpush.msra.mxu0 %v661
    %v663 = vand.u32 %v73, 4294901760
    %v664 = vsub.f32 %v73, %v663
    %665 = vmatpush.msra.mxu0 %v664
    %v666 = vand.u32 %v72, 4294901760
    %v667 = vsub.f32 %v72, %v666
    %668 = vmatpush.msra.mxu0 %v667
    %v669 = vand.u32 %v71, 4294901760
    %v670 = vsub.f32 %v71, %v669
    %671 = vmatpush.msra.mxu0 %v670
    %v672 = vand.u32 %v70, 4294901760
    %v673 = vsub.f32 %v70, %v672
    %674 = vmatpush.msra.mxu0 %v673
    %v675 = vand.u32 %v69, 4294901760
    %v676 = vsub.f32 %v69, %v675
    %677 = vmatpush.msra.mxu0 %v676
    %v678 = vand.u32 %v68, 4294901760
    %v679 = vsub.f32 %v68, %v678
    %680 = vmatpush.msra.mxu0 %v679
    %v681 = vand.u32 %v67, 4294901760
    %v682 = vsub.f32 %v67, %v681
    %683 = vmatpush.msra.mxu0 %v682
    %v684 = vand.u32 %v66, 4294901760
    %v685 = vsub.f32 %v66, %v684
    %686 = vmatpush.msra.mxu0 %v685
    %v687 = vand.u32 %v44, 4294901760
    %v688 = vsub.f32 %v44, %v687
    %689 = vmatmul.f32.gmra.mxu0 %v688
    %v690 = vpop.f32.mrf.mxu0
    %v691 = vadd.f32 %v637, %v690
    %692 = vdwg.mxu0
    %v693 = vand.u32 %v81, 4294901760
    %694 = vmatpush.msra.mxu0 %v693
    %v695 = vand.u32 %v80, 4294901760
    %696 = vmatpush.msra.mxu0 %v695
    %v697 = vand.u32 %v79, 4294901760
    %698 = vmatpush.msra.mxu0 %v697
    %v699 = vand.u32 %v78, 4294901760
    %700 = vmatpush.msra.mxu0 %v699
    %v701 = vand.u32 %v77, 4294901760
    %702 = vmatpush.msra.mxu0 %v701
    %v703 = vand.u32 %v76, 4294901760
    %704 = vmatpush.msra.mxu0 %v703
    %v705 = vand.u32 %v75, 4294901760
    %706 = vmatpush.msra.mxu0 %v705
    %v707 = vand.u32 %v74, 4294901760
    %708 = vmatpush.msra.mxu0 %v707
    %v709 = vand.u32 %v73, 4294901760
    %710 = vmatpush.msra.mxu0 %v709
    %v711 = vand.u32 %v72, 4294901760
    %712 = vmatpush.msra.mxu0 %v711
    %v713 = vand.u32 %v71, 4294901760
    %714 = vmatpush.msra.mxu0 %v713
    %v715 = vand.u32 %v70, 4294901760
    %716 = vmatpush.msra.mxu0 %v715
    %v717 = vand.u32 %v69, 4294901760
    %718 = vmatpush.msra.mxu0 %v717
    %v719 = vand.u32 %v68, 4294901760
    %720 = vmatpush.msra.mxu0 %v719
    %v721 = vand.u32 %v67, 4294901760
    %722 = vmatpush.msra.mxu0 %v721
    %v723 = vand.u32 %v66, 4294901760
    %724 = vmatpush.msra.mxu0 %v723
    %v725 = vand.u32 %v44, 4294901760
    %v726 = vsub.f32 %v44, %v725
    %v727 = vand.u32 %v726, 4294901760
    %728 = vmatmul.f32.gmra.mxu0 %v727
    %v729 = vpop.f32.mrf.mxu0
    %v730 = vadd.f32 %v691, %v729
    %731 = vdwg.mxu0
    %v732 = vand.u32 %v81, 4294901760
    %v733 = vsub.f32 %v81, %v732
    %v734 = vand.u32 %v733, 4294901760
    %735 = vmatpush.msra.mxu0 %v734
    %v736 = vand.u32 %v80, 4294901760
    %v737 = vsub.f32 %v80, %v736
    %v738 = vand.u32 %v737, 4294901760
    %739 = vmatpush.msra.mxu0 %v738
    %v740 = vand.u32 %v79, 4294901760
    %v741 = vsub.f32 %v79, %v740
    %v742 = vand.u32 %v741, 4294901760
    %743 = vmatpush.msra.mxu0 %v742
    %v744 = vand.u32 %v78, 4294901760
    %v745 = vsub.f32 %v78, %v744
    %v746 = vand.u32 %v745, 4294901760
    %747 = vmatpush.msra.mxu0 %v746
    %v748 = vand.u32 %v77, 4294901760
    %v749 = vsub.f32 %v77, %v748
    %v750 = vand.u32 %v749, 4294901760
    %751 = vmatpush.msra.mxu0 %v750
    %v752 = vand.u32 %v76, 4294901760
    %v753 = vsub.f32 %v76, %v752
    %v754 = vand.u32 %v753, 4294901760
    %755 = vmatpush.msra.mxu0 %v754
    %v756 = vand.u32 %v75, 4294901760
    %v757 = vsub.f32 %v75, %v756
    %v758 = vand.u32 %v757, 4294901760
    %759 = vmatpush.msra.mxu0 %v758
    %v760 = vand.u32 %v74, 4294901760
    %v761 = vsub.f32 %v74, %v760
    %v762 = vand.u32 %v761, 4294901760
    %763 = vmatpush.msra.mxu0 %v762
    %v764 = vand.u32 %v73, 4294901760
    %v765 = vsub.f32 %v73, %v764
    %v766 = vand.u32 %v765, 4294901760
    %767 = vmatpush.msra.mxu0 %v766
    %v768 = vand.u32 %v72, 4294901760
    %v769 = vsub.f32 %v72, %v768
    %v770 = vand.u32 %v769, 4294901760
    %771 = vmatpush.msra.mxu0 %v770
    %v772 = vand.u32 %v71, 4294901760
    %v773 = vsub.f32 %v71, %v772
    %v774 = vand.u32 %v773, 4294901760
    %775 = vmatpush.msra.mxu0 %v774
    %v776 = vand.u32 %v70, 4294901760
    %v777 = vsub.f32 %v70, %v776
    %v778 = vand.u32 %v777, 4294901760
    %779 = vmatpush.msra.mxu0 %v778
    %v780 = vand.u32 %v69, 4294901760
    %v781 = vsub.f32 %v69, %v780
    %v782 = vand.u32 %v781, 4294901760
    %783 = vmatpush.msra.mxu0 %v782
    %v784 = vand.u32 %v68, 4294901760
    %v785 = vsub.f32 %v68, %v784
    %v786 = vand.u32 %v785, 4294901760
    %787 = vmatpush.msra.mxu0 %v786
    %v788 = vand.u32 %v67, 4294901760
    %v789 = vsub.f32 %v67, %v788
    %v790 = vand.u32 %v789, 4294901760
    %791 = vmatpush.msra.mxu0 %v790
    %v792 = vand.u32 %v66, 4294901760
    %v793 = vsub.f32 %v66, %v792
    %v794 = vand.u32 %v793, 4294901760
    %795 = vmatpush.msra.mxu0 %v794
    %v796 = vand.u32 %v44, 4294901760
    %797 = vmatmul.f32.gmra.mxu0 %v796
    %v798 = vpop.f32.mrf.mxu0
    %v799 = vadd.f32 %v730, %v798
    %800 = vdwg.mxu0
    %v801 = vand.u32 %v81, 4294901760
    %802 = vmatpush.msra.mxu0 %v801
    %v803 = vand.u32 %v80, 4294901760
    %804 = vmatpush.msra.mxu0 %v803
    %v805 = vand.u32 %v79, 4294901760
    %806 = vmatpush.msra.mxu0 %v805
    %v807 = vand.u32 %v78, 4294901760
    %808 = vmatpush.msra.mxu0 %v807
    %v809 = vand.u32 %v77, 4294901760
    %810 = vmatpush.msra.mxu0 %v809
    %v811 = vand.u32 %v76, 4294901760
    %812 = vmatpush.msra.mxu0 %v811
    %v813 = vand.u32 %v75, 4294901760
    %814 = vmatpush.msra.mxu0 %v813
    %v815 = vand.u32 %v74, 4294901760
    %816 = vmatpush.msra.mxu0 %v815
    %v817 = vand.u32 %v73, 4294901760
    %818 = vmatpush.msra.mxu0 %v817
    %v819 = vand.u32 %v72, 4294901760
    %820 = vmatpush.msra.mxu0 %v819
    %v821 = vand.u32 %v71, 4294901760
    %822 = vmatpush.msra.mxu0 %v821
    %v823 = vand.u32 %v70, 4294901760
    %824 = vmatpush.msra.mxu0 %v823
    %v825 = vand.u32 %v69, 4294901760
    %826 = vmatpush.msra.mxu0 %v825
    %v827 = vand.u32 %v68, 4294901760
    %828 = vmatpush.msra.mxu0 %v827
    %v829 = vand.u32 %v67, 4294901760
    %830 = vmatpush.msra.mxu0 %v829
    %v831 = vand.u32 %v66, 4294901760
    %832 = vmatpush.msra.mxu0 %v831
    %v833 = vand.u32 %v44, 4294901760
    %834 = vmatmul.f32.gmra.mxu0 %v833
    %v835 = vpop.f32.mrf.mxu0
    %v836 = vadd.f32 %v799, %v835
    %837 = vdwg.mxu0
    %v838 = vand.u32 %v97, 4294901760
    %839 = vmatpush.msra.mxu0 %v838
    %v840 = vand.u32 %v96, 4294901760
    %841 = vmatpush.msra.mxu0 %v840
    %v842 = vand.u32 %v95, 4294901760
    %843 = vmatpush.msra.mxu0 %v842
    %v844 = vand.u32 %v94, 4294901760
    %845 = vmatpush.msra.mxu0 %v844
    %v846 = vand.u32 %v93, 4294901760
    %847 = vmatpush.msra.mxu0 %v846
    %v848 = vand.u32 %v92, 4294901760
    %849 = vmatpush.msra.mxu0 %v848
    %v850 = vand.u32 %v91, 4294901760
    %851 = vmatpush.msra.mxu0 %v850
    %v852 = vand.u32 %v90, 4294901760
    %853 = vmatpush.msra.mxu0 %v852
    %v854 = vand.u32 %v89, 4294901760
    %855 = vmatpush.msra.mxu0 %v854
    %v856 = vand.u32 %v88, 4294901760
    %857 = vmatpush.msra.mxu0 %v856
    %v858 = vand.u32 %v87, 4294901760
    %859 = vmatpush.msra.mxu0 %v858
    %v860 = vand.u32 %v86, 4294901760
    %861 = vmatpush.msra.mxu0 %v860
    %v862 = vand.u32 %v85, 4294901760
    %863 = vmatpush.msra.mxu0 %v862
    %v864 = vand.u32 %v84, 4294901760
    %865 = vmatpush.msra.mxu0 %v864
    %v866 = vand.u32 %v83, 4294901760
    %867 = vmatpush.msra.mxu0 %v866
    %v868 = vand.u32 %v82, 4294901760
    %869 = vmatpush.msra.mxu0 %v868
    %v870 = vand.u32 %v45, 4294901760
    %v871 = vsub.f32 %v45, %v870
    %v872 = vand.u32 %v871, 4294901760
    %v873 = vsub.f32 %v871, %v872
    %v874 = vand.u32 %v873, 4294901760
    %875 = vmatmul.f32.gmra.mxu0 %v874
    %v876 = vpop.f32.mrf.mxu0
    %v877 = vadd.f32 %v836, %v876
    %878 = vdwg.mxu0
    %v879 = vand.u32 %v97, 4294901760
    %v880 = vsub.f32 %v97, %v879
    %v881 = vand.u32 %v880, 4294901760
    %v882 = vsub.f32 %v880, %v881
    %v883 = vand.u32 %v882, 4294901760
    %884 = vmatpush.msra.mxu0 %v883
    %v885 = vand.u32 %v96, 4294901760
    %v886 = vsub.f32 %v96, %v885
    %v887 = vand.u32 %v886, 4294901760
    %v888 = vsub.f32 %v886, %v887
    %v889 = vand.u32 %v888, 4294901760
    %890 = vmatpush.msra.mxu0 %v889
    %v891 = vand.u32 %v95, 4294901760
    %v892 = vsub.f32 %v95, %v891
    %v893 = vand.u32 %v892, 4294901760
    %v894 = vsub.f32 %v892, %v893
    %v895 = vand.u32 %v894, 4294901760
    %896 = vmatpush.msra.mxu0 %v895
    %v897 = vand.u32 %v94, 4294901760
    %v898 = vsub.f32 %v94, %v897
    %v899 = vand.u32 %v898, 4294901760
    %v900 = vsub.f32 %v898, %v899
    %v901 = vand.u32 %v900, 4294901760
    %902 = vmatpush.msra.mxu0 %v901
    %v903 = vand.u32 %v93, 4294901760
    %v904 = vsub.f32 %v93, %v903
    %v905 = vand.u32 %v904, 4294901760
    %v906 = vsub.f32 %v904, %v905
    %v907 = vand.u32 %v906, 4294901760
    %908 = vmatpush.msra.mxu0 %v907
    %v909 = vand.u32 %v92, 4294901760
    %v910 = vsub.f32 %v92, %v909
    %v911 = vand.u32 %v910, 4294901760
    %v912 = vsub.f32 %v910, %v911
    %v913 = vand.u32 %v912, 4294901760
    %914 = vmatpush.msra.mxu0 %v913
    %v915 = vand.u32 %v91, 4294901760
    %v916 = vsub.f32 %v91, %v915
    %v917 = vand.u32 %v916, 4294901760
    %v918 = vsub.f32 %v916, %v917
    %v919 = vand.u32 %v918, 4294901760
    %920 = vmatpush.msra.mxu0 %v919
    %v921 = vand.u32 %v90, 4294901760
    %v922 = vsub.f32 %v90, %v921
    %v923 = vand.u32 %v922, 4294901760
    %v924 = vsub.f32 %v922, %v923
    %v925 = vand.u32 %v924, 4294901760
    %926 = vmatpush.msra.mxu0 %v925
    %v927 = vand.u32 %v89, 4294901760
    %v928 = vsub.f32 %v89, %v927
    %v929 = vand.u32 %v928, 4294901760
    %v930 = vsub.f32 %v928, %v929
    %v931 = vand.u32 %v930, 4294901760
    %932 = vmatpush.msra.mxu0 %v931
    %v933 = vand.u32 %v88, 4294901760
    %v934 = vsub.f32 %v88, %v933
    %v935 = vand.u32 %v934, 4294901760
    %v936 = vsub.f32 %v934, %v935
    %v937 = vand.u32 %v936, 4294901760
    %938 = vmatpush.msra.mxu0 %v937
    %v939 = vand.u32 %v87, 4294901760
    %v940 = vsub.f32 %v87, %v939
    %v941 = vand.u32 %v940, 4294901760
    %v942 = vsub.f32 %v940, %v941
    %v943 = vand.u32 %v942, 4294901760
    %944 = vmatpush.msra.mxu0 %v943
    %v945 = vand.u32 %v86, 4294901760
    %v946 = vsub.f32 %v86, %v945
    %v947 = vand.u32 %v946, 4294901760
    %v948 = vsub.f32 %v946, %v947
    %v949 = vand.u32 %v948, 4294901760
    %950 = vmatpush.msra.mxu0 %v949
    %v951 = vand.u32 %v85, 4294901760
    %v952 = vsub.f32 %v85, %v951
    %v953 = vand.u32 %v952, 4294901760
    %v954 = vsub.f32 %v952, %v953
    %v955 = vand.u32 %v954, 4294901760
    %956 = vmatpush.msra.mxu0 %v955
    %v957 = vand.u32 %v84, 4294901760
    %v958 = vsub.f32 %v84, %v957
    %v959 = vand.u32 %v958, 4294901760
    %v960 = vsub.f32 %v958, %v959
    %v961 = vand.u32 %v960, 4294901760
    %962 = vmatpush.msra.mxu0 %v961
    %v963 = vand.u32 %v83, 4294901760
    %v964 = vsub.f32 %v83, %v963
    %v965 = vand.u32 %v964, 4294901760
    %v966 = vsub.f32 %v964, %v965
    %v967 = vand.u32 %v966, 4294901760
    %968 = vmatpush.msra.mxu0 %v967
    %v969 = vand.u32 %v82, 4294901760
    %v970 = vsub.f32 %v82, %v969
    %v971 = vand.u32 %v970, 4294901760
    %v972 = vsub.f32 %v970, %v971
    %v973 = vand.u32 %v972, 4294901760
    %974 = vmatpush.msra.mxu0 %v973
    %v975 = vand.u32 %v45, 4294901760
    %976 = vmatmul.f32.gmra.mxu0 %v975
    %v977 = vpop.f32.mrf.mxu0
    %v978 = vadd.f32 %v877, %v977
    %979 = vdwg.mxu0
    %v980 = vand.u32 %v97, 4294901760
    %v981 = vsub.f32 %v97, %v980
    %982 = vmatpush.msra.mxu0 %v981
    %v983 = vand.u32 %v96, 4294901760
    %v984 = vsub.f32 %v96, %v983
    %985 = vmatpush.msra.mxu0 %v984
    %v986 = vand.u32 %v95, 4294901760
    %v987 = vsub.f32 %v95, %v986
    %988 = vmatpush.msra.mxu0 %v987
    %v989 = vand.u32 %v94, 4294901760
    %v990 = vsub.f32 %v94, %v989
    %991 = vmatpush.msra.mxu0 %v990
    %v992 = vand.u32 %v93, 4294901760
    %v993 = vsub.f32 %v93, %v992
    %994 = vmatpush.msra.mxu0 %v993
    %v995 = vand.u32 %v92, 4294901760
    %v996 = vsub.f32 %v92, %v995
    %997 = vmatpush.msra.mxu0 %v996
    %v998 = vand.u32 %v91, 4294901760
    %v999 = vsub.f32 %v91, %v998
    %1000 = vmatpush.msra.mxu0 %v999
    %v1001 = vand.u32 %v90, 4294901760
    %v1002 = vsub.f32 %v90, %v1001
    %1003 = vmatpush.msra.mxu0 %v1002
    %v1004 = vand.u32 %v89, 4294901760
    %v1005 = vsub.f32 %v89, %v1004
    %1006 = vmatpush.msra.mxu0 %v1005
    %v1007 = vand.u32 %v88, 4294901760
    %v1008 = vsub.f32 %v88, %v1007
    %1009 = vmatpush.msra.mxu0 %v1008
    %v1010 = vand.u32 %v87, 4294901760
    %v1011 = vsub.f32 %v87, %v1010
    %1012 = vmatpush.msra.mxu0 %v1011
    %v1013 = vand.u32 %v86, 4294901760
    %v1014 = vsub.f32 %v86, %v1013
    %1015 = vmatpush.msra.mxu0 %v1014
    %v1016 = vand.u32 %v85, 4294901760
    %v1017 = vsub.f32 %v85, %v1016
    %1018 = vmatpush.msra.mxu0 %v1017
    %v1019 = vand.u32 %v84, 4294901760
    %v1020 = vsub.f32 %v84, %v1019
    %1021 = vmatpush.msra.mxu0 %v1020
    %v1022 = vand.u32 %v83, 4294901760
    %v1023 = vsub.f32 %v83, %v1022
    %1024 = vmatpush.msra.mxu0 %v1023
    %v1025 = vand.u32 %v82, 4294901760
    %v1026 = vsub.f32 %v82, %v1025
    %1027 = vmatpush.msra.mxu0 %v1026
    %v1028 = vand.u32 %v45, 4294901760
    %v1029 = vsub.f32 %v45, %v1028
    %1030 = vmatmul.f32.gmra.mxu0 %v1029
    %v1031 = vpop.f32.mrf.mxu0
    %v1032 = vadd.f32 %v978, %v1031
    %1033 = vdwg.mxu0
    %v1034 = vand.u32 %v97, 4294901760
    %1035 = vmatpush.msra.mxu0 %v1034
    %v1036 = vand.u32 %v96, 4294901760
    %1037 = vmatpush.msra.mxu0 %v1036
    %v1038 = vand.u32 %v95, 4294901760
    %1039 = vmatpush.msra.mxu0 %v1038
    %v1040 = vand.u32 %v94, 4294901760
    %1041 = vmatpush.msra.mxu0 %v1040
    %v1042 = vand.u32 %v93, 4294901760
    %1043 = vmatpush.msra.mxu0 %v1042
    %v1044 = vand.u32 %v92, 4294901760
    %1045 = vmatpush.msra.mxu0 %v1044
    %v1046 = vand.u32 %v91, 4294901760
    %1047 = vmatpush.msra.mxu0 %v1046
    %v1048 = vand.u32 %v90, 4294901760
    %1049 = vmatpush.msra.mxu0 %v1048
    %v1050 = vand.u32 %v89, 4294901760
    %1051 = vmatpush.msra.mxu0 %v1050
    %v1052 = vand.u32 %v88, 4294901760
    %1053 = vmatpush.msra.mxu0 %v1052
    %v1054 = vand.u32 %v87, 4294901760
    %1055 = vmatpush.msra.mxu0 %v1054
    %v1056 = vand.u32 %v86, 4294901760
    %1057 = vmatpush.msra.mxu0 %v1056
    %v1058 = vand.u32 %v85, 4294901760
    %1059 = vmatpush.msra.mxu0 %v1058
    %v1060 = vand.u32 %v84, 4294901760
    %1061 = vmatpush.msra.mxu0 %v1060
    %v1062 = vand.u32 %v83, 4294901760
    %1063 = vmatpush.msra.mxu0 %v1062
    %v1064 = vand.u32 %v82, 4294901760
    %1065 = vmatpush.msra.mxu0 %v1064
    %v1066 = vand.u32 %v45, 4294901760
    %v1067 = vsub.f32 %v45, %v1066
    %v1068 = vand.u32 %v1067, 4294901760
    %1069 = vmatmul.f32.gmra.mxu0 %v1068
    %v1070 = vpop.f32.mrf.mxu0
    %v1071 = vadd.f32 %v1032, %v1070
    %1072 = vdwg.mxu0
    %v1073 = vand.u32 %v97, 4294901760
    %v1074 = vsub.f32 %v97, %v1073
    %v1075 = vand.u32 %v1074, 4294901760
    %1076 = vmatpush.msra.mxu0 %v1075
    %v1077 = vand.u32 %v96, 4294901760
    %v1078 = vsub.f32 %v96, %v1077
    %v1079 = vand.u32 %v1078, 4294901760
    %1080 = vmatpush.msra.mxu0 %v1079
    %v1081 = vand.u32 %v95, 4294901760
    %v1082 = vsub.f32 %v95, %v1081
    %v1083 = vand.u32 %v1082, 4294901760
    %1084 = vmatpush.msra.mxu0 %v1083
    %v1085 = vand.u32 %v94, 4294901760
    %v1086 = vsub.f32 %v94, %v1085
    %v1087 = vand.u32 %v1086, 4294901760
    %1088 = vmatpush.msra.mxu0 %v1087
    %v1089 = vand.u32 %v93, 4294901760
    %v1090 = vsub.f32 %v93, %v1089
    %v1091 = vand.u32 %v1090, 4294901760
    %1092 = vmatpush.msra.mxu0 %v1091
    %v1093 = vand.u32 %v92, 4294901760
    %v1094 = vsub.f32 %v92, %v1093
    %v1095 = vand.u32 %v1094, 4294901760
    %1096 = vmatpush.msra.mxu0 %v1095
    %v1097 = vand.u32 %v91, 4294901760
    %v1098 = vsub.f32 %v91, %v1097
    %v1099 = vand.u32 %v1098, 4294901760
    %1100 = vmatpush.msra.mxu0 %v1099
    %v1101 = vand.u32 %v90, 4294901760
    %v1102 = vsub.f32 %v90, %v1101
    %v1103 = vand.u32 %v1102, 4294901760
    %1104 = vmatpush.msra.mxu0 %v1103
    %v1105 = vand.u32 %v89, 4294901760
    %v1106 = vsub.f32 %v89, %v1105
    %v1107 = vand.u32 %v1106, 4294901760
    %1108 = vmatpush.msra.mxu0 %v1107
    %v1109 = vand.u32 %v88, 4294901760
    %v1110 = vsub.f32 %v88, %v1109
    %v1111 = vand.u32 %v1110, 4294901760
    %1112 = vmatpush.msra.mxu0 %v1111
    %v1113 = vand.u32 %v87, 4294901760
    %v1114 = vsub.f32 %v87, %v1113
    %v1115 = vand.u32 %v1114, 4294901760
    %1116 = vmatpush.msra.mxu0 %v1115
    %v1117 = vand.u32 %v86, 4294901760
    %v1118 = vsub.f32 %v86, %v1117
    %v1119 = vand.u32 %v1118, 4294901760
    %1120 = vmatpush.msra.mxu0 %v1119
    %v1121 = vand.u32 %v85, 4294901760
    %v1122 = vsub.f32 %v85, %v1121
    %v1123 = vand.u32 %v1122, 4294901760
    %1124 = vmatpush.msra.mxu0 %v1123
    %v1125 = vand.u32 %v84, 4294901760
    %v1126 = vsub.f32 %v84, %v1125
    %v1127 = vand.u32 %v1126, 4294901760
    %1128 = vmatpush.msra.mxu0 %v1127
    %v1129 = vand.u32 %v83, 4294901760
    %v1130 = vsub.f32 %v83, %v1129
    %v1131 = vand.u32 %v1130, 4294901760
    %1132 = vmatpush.msra.mxu0 %v1131
    %v1133 = vand.u32 %v82, 4294901760
    %v1134 = vsub.f32 %v82, %v1133
    %v1135 = vand.u32 %v1134, 4294901760
    %1136 = vmatpush.msra.mxu0 %v1135
    %v1137 = vand.u32 %v45, 4294901760
    %1138 = vmatmul.f32.gmra.mxu0 %v1137
    %v1139 = vpop.f32.mrf.mxu0
    %v1140 = vadd.f32 %v1071, %v1139
    %1141 = vdwg.mxu0
    %v1142 = vand.u32 %v97, 4294901760
    %1143 = vmatpush.msra.mxu0 %v1142
    %v1144 = vand.u32 %v96, 4294901760
    %1145 = vmatpush.msra.mxu0 %v1144
    %v1146 = vand.u32 %v95, 4294901760
    %1147 = vmatpush.msra.mxu0 %v1146
    %v1148 = vand.u32 %v94, 4294901760
    %1149 = vmatpush.msra.mxu0 %v1148
    %v1150 = vand.u32 %v93, 4294901760
    %1151 = vmatpush.msra.mxu0 %v1150
    %v1152 = vand.u32 %v92, 4294901760
    %1153 = vmatpush.msra.mxu0 %v1152
    %v1154 = vand.u32 %v91, 4294901760
    %1155 = vmatpush.msra.mxu0 %v1154
    %v1156 = vand.u32 %v90, 4294901760
    %1157 = vmatpush.msra.mxu0 %v1156
    %v1158 = vand.u32 %v89, 4294901760
    %1159 = vmatpush.msra.mxu0 %v1158
    %v1160 = vand.u32 %v88, 4294901760
    %1161 = vmatpush.msra.mxu0 %v1160
    %v1162 = vand.u32 %v87, 4294901760
    %1163 = vmatpush.msra.mxu0 %v1162
    %v1164 = vand.u32 %v86, 4294901760
    %1165 = vmatpush.msra.mxu0 %v1164
    %v1166 = vand.u32 %v85, 4294901760
    %1167 = vmatpush.msra.mxu0 %v1166
    %v1168 = vand.u32 %v84, 4294901760
    %1169 = vmatpush.msra.mxu0 %v1168
    %v1170 = vand.u32 %v83, 4294901760
    %1171 = vmatpush.msra.mxu0 %v1170
    %v1172 = vand.u32 %v82, 4294901760
    %1173 = vmatpush.msra.mxu0 %v1172
    %v1174 = vand.u32 %v45, 4294901760
    %1175 = vmatmul.f32.gmra.mxu0 %v1174
    %v1176 = vpop.f32.mrf.mxu0
    %v1177 = vadd.f32 %v1140, %v1176
    %1178 = vdwg.mxu0
    %v1179 = vand.u32 %v113, 4294901760
    %1180 = vmatpush.msra.mxu0 %v1179
    %v1181 = vand.u32 %v112, 4294901760
    %1182 = vmatpush.msra.mxu0 %v1181
    %v1183 = vand.u32 %v111, 4294901760
    %1184 = vmatpush.msra.mxu0 %v1183
    %v1185 = vand.u32 %v110, 4294901760
    %1186 = vmatpush.msra.mxu0 %v1185
    %v1187 = vand.u32 %v109, 4294901760
    %1188 = vmatpush.msra.mxu0 %v1187
    %v1189 = vand.u32 %v108, 4294901760
    %1190 = vmatpush.msra.mxu0 %v1189
    %v1191 = vand.u32 %v107, 4294901760
    %1192 = vmatpush.msra.mxu0 %v1191
    %v1193 = vand.u32 %v106, 4294901760
    %1194 = vmatpush.msra.mxu0 %v1193
    %v1195 = vand.u32 %v105, 4294901760
    %1196 = vmatpush.msra.mxu0 %v1195
    %v1197 = vand.u32 %v104, 4294901760
    %1198 = vmatpush.msra.mxu0 %v1197
    %v1199 = vand.u32 %v103, 4294901760
    %1200 = vmatpush.msra.mxu0 %v1199
    %v1201 = vand.u32 %v102, 4294901760
    %1202 = vmatpush.msra.mxu0 %v1201
    %v1203 = vand.u32 %v101, 4294901760
    %1204 = vmatpush.msra.mxu0 %v1203
    %v1205 = vand.u32 %v100, 4294901760
    %1206 = vmatpush.msra.mxu0 %v1205
    %v1207 = vand.u32 %v99, 4294901760
    %1208 = vmatpush.msra.mxu0 %v1207
    %v1209 = vand.u32 %v98, 4294901760
    %1210 = vmatpush.msra.mxu0 %v1209
    %v1211 = vand.u32 %v46, 4294901760
    %v1212 = vsub.f32 %v46, %v1211
    %v1213 = vand.u32 %v1212, 4294901760
    %v1214 = vsub.f32 %v1212, %v1213
    %v1215 = vand.u32 %v1214, 4294901760
    %1216 = vmatmul.f32.gmra.mxu0 %v1215
    %v1217 = vpop.f32.mrf.mxu0
    %v1218 = vadd.f32 %v1177, %v1217
    %1219 = vdwg.mxu0
    %v1220 = vand.u32 %v113, 4294901760
    %v1221 = vsub.f32 %v113, %v1220
    %v1222 = vand.u32 %v1221, 4294901760
    %v1223 = vsub.f32 %v1221, %v1222
    %v1224 = vand.u32 %v1223, 4294901760
    %1225 = vmatpush.msra.mxu0 %v1224
    %v1226 = vand.u32 %v112, 4294901760
    %v1227 = vsub.f32 %v112, %v1226
    %v1228 = vand.u32 %v1227, 4294901760
    %v1229 = vsub.f32 %v1227, %v1228
    %v1230 = vand.u32 %v1229, 4294901760
    %1231 = vmatpush.msra.mxu0 %v1230
    %v1232 = vand.u32 %v111, 4294901760
    %v1233 = vsub.f32 %v111, %v1232
    %v1234 = vand.u32 %v1233, 4294901760
    %v1235 = vsub.f32 %v1233, %v1234
    %v1236 = vand.u32 %v1235, 4294901760
    %1237 = vmatpush.msra.mxu0 %v1236
    %v1238 = vand.u32 %v110, 4294901760
    %v1239 = vsub.f32 %v110, %v1238
    %v1240 = vand.u32 %v1239, 4294901760
    %v1241 = vsub.f32 %v1239, %v1240
    %v1242 = vand.u32 %v1241, 4294901760
    %1243 = vmatpush.msra.mxu0 %v1242
    %v1244 = vand.u32 %v109, 4294901760
    %v1245 = vsub.f32 %v109, %v1244
    %v1246 = vand.u32 %v1245, 4294901760
    %v1247 = vsub.f32 %v1245, %v1246
    %v1248 = vand.u32 %v1247, 4294901760
    %1249 = vmatpush.msra.mxu0 %v1248
    %v1250 = vand.u32 %v108, 4294901760
    %v1251 = vsub.f32 %v108, %v1250
    %v1252 = vand.u32 %v1251, 4294901760
    %v1253 = vsub.f32 %v1251, %v1252
    %v1254 = vand.u32 %v1253, 4294901760
    %1255 = vmatpush.msra.mxu0 %v1254
    %v1256 = vand.u32 %v107, 4294901760
    %v1257 = vsub.f32 %v107, %v1256
    %v1258 = vand.u32 %v1257, 4294901760
    %v1259 = vsub.f32 %v1257, %v1258
    %v1260 = vand.u32 %v1259, 4294901760
    %1261 = vmatpush.msra.mxu0 %v1260
    %v1262 = vand.u32 %v106, 4294901760
    %v1263 = vsub.f32 %v106, %v1262
    %v1264 = vand.u32 %v1263, 4294901760
    %v1265 = vsub.f32 %v1263, %v1264
    %v1266 = vand.u32 %v1265, 4294901760
    %1267 = vmatpush.msra.mxu0 %v1266
    %v1268 = vand.u32 %v105, 4294901760
    %v1269 = vsub.f32 %v105, %v1268
    %v1270 = vand.u32 %v1269, 4294901760
    %v1271 = vsub.f32 %v1269, %v1270
    %v1272 = vand.u32 %v1271, 4294901760
    %1273 = vmatpush.msra.mxu0 %v1272
    %v1274 = vand.u32 %v104, 4294901760
    %v1275 = vsub.f32 %v104, %v1274
    %v1276 = vand.u32 %v1275, 4294901760
    %v1277 = vsub.f32 %v1275, %v1276
    %v1278 = vand.u32 %v1277, 4294901760
    %1279 = vmatpush.msra.mxu0 %v1278
    %v1280 = vand.u32 %v103, 4294901760
    %v1281 = vsub.f32 %v103, %v1280
    %v1282 = vand.u32 %v1281, 4294901760
    %v1283 = vsub.f32 %v1281, %v1282
    %v1284 = vand.u32 %v1283, 4294901760
    %1285 = vmatpush.msra.mxu0 %v1284
    %v1286 = vand.u32 %v102, 4294901760
    %v1287 = vsub.f32 %v102, %v1286
    %v1288 = vand.u32 %v1287, 4294901760
    %v1289 = vsub.f32 %v1287, %v1288
    %v1290 = vand.u32 %v1289, 4294901760
    %1291 = vmatpush.msra.mxu0 %v1290
    %v1292 = vand.u32 %v101, 4294901760
    %v1293 = vsub.f32 %v101, %v1292
    %v1294 = vand.u32 %v1293, 4294901760
    %v1295 = vsub.f32 %v1293, %v1294
    %v1296 = vand.u32 %v1295, 4294901760
    %1297 = vmatpush.msra.mxu0 %v1296
    %v1298 = vand.u32 %v100, 4294901760
    %v1299 = vsub.f32 %v100, %v1298
    %v1300 = vand.u32 %v1299, 4294901760
    %v1301 = vsub.f32 %v1299, %v1300
    %v1302 = vand.u32 %v1301, 4294901760
    %1303 = vmatpush.msra.mxu0 %v1302
    %v1304 = vand.u32 %v99, 4294901760
    %v1305 = vsub.f32 %v99, %v1304
    %v1306 = vand.u32 %v1305, 4294901760
    %v1307 = vsub.f32 %v1305, %v1306
    %v1308 = vand.u32 %v1307, 4294901760
    %1309 = vmatpush.msra.mxu0 %v1308
    %v1310 = vand.u32 %v98, 4294901760
    %v1311 = vsub.f32 %v98, %v1310
    %v1312 = vand.u32 %v1311, 4294901760
    %v1313 = vsub.f32 %v1311, %v1312
    %v1314 = vand.u32 %v1313, 4294901760
    %1315 = vmatpush.msra.mxu0 %v1314
    %v1316 = vand.u32 %v46, 4294901760
    %1317 = vmatmul.f32.gmra.mxu0 %v1316
    %v1318 = vpop.f32.mrf.mxu0
    %v1319 = vadd.f32 %v1218, %v1318
    %1320 = vdwg.mxu0
    %v1321 = vand.u32 %v113, 4294901760
    %v1322 = vsub.f32 %v113, %v1321
    %1323 = vmatpush.msra.mxu0 %v1322
    %v1324 = vand.u32 %v112, 4294901760
    %v1325 = vsub.f32 %v112, %v1324
    %1326 = vmatpush.msra.mxu0 %v1325
    %v1327 = vand.u32 %v111, 4294901760
    %v1328 = vsub.f32 %v111, %v1327
    %1329 = vmatpush.msra.mxu0 %v1328
    %v1330 = vand.u32 %v110, 4294901760
    %v1331 = vsub.f32 %v110, %v1330
    %1332 = vmatpush.msra.mxu0 %v1331
    %v1333 = vand.u32 %v109, 4294901760
    %v1334 = vsub.f32 %v109, %v1333
    %1335 = vmatpush.msra.mxu0 %v1334
    %v1336 = vand.u32 %v108, 4294901760
    %v1337 = vsub.f32 %v108, %v1336
    %1338 = vmatpush.msra.mxu0 %v1337
    %v1339 = vand.u32 %v107, 4294901760
    %v1340 = vsub.f32 %v107, %v1339
    %1341 = vmatpush.msra.mxu0 %v1340
    %v1342 = vand.u32 %v106, 4294901760
    %v1343 = vsub.f32 %v106, %v1342
    %1344 = vmatpush.msra.mxu0 %v1343
    %v1345 = vand.u32 %v105, 4294901760
    %v1346 = vsub.f32 %v105, %v1345
    %1347 = vmatpush.msra.mxu0 %v1346
    %v1348 = vand.u32 %v104, 4294901760
    %v1349 = vsub.f32 %v104, %v1348
    %1350 = vmatpush.msra.mxu0 %v1349
    %v1351 = vand.u32 %v103, 4294901760
    %v1352 = vsub.f32 %v103, %v1351
    %1353 = vmatpush.msra.mxu0 %v1352
    %v1354 = vand.u32 %v102, 4294901760
    %v1355 = vsub.f32 %v102, %v1354
    %1356 = vmatpush.msra.mxu0 %v1355
    %v1357 = vand.u32 %v101, 4294901760
    %v1358 = vsub.f32 %v101, %v1357
    %1359 = vmatpush.msra.mxu0 %v1358
    %v1360 = vand.u32 %v100, 4294901760
    %v1361 = vsub.f32 %v100, %v1360
    %1362 = vmatpush.msra.mxu0 %v1361
    %v1363 = vand.u32 %v99, 4294901760
    %v1364 = vsub.f32 %v99, %v1363
    %1365 = vmatpush.msra.mxu0 %v1364
    %v1366 = vand.u32 %v98, 4294901760
    %v1367 = vsub.f32 %v98, %v1366
    %1368 = vmatpush.msra.mxu0 %v1367
    %v1369 = vand.u32 %v46, 4294901760
    %v1370 = vsub.f32 %v46, %v1369
    %1371 = vmatmul.f32.gmra.mxu0 %v1370
    %v1372 = vpop.f32.mrf.mxu0
    %v1373 = vadd.f32 %v1319, %v1372
    %1374 = vdwg.mxu0
    %v1375 = vand.u32 %v113, 4294901760
    %1376 = vmatpush.msra.mxu0 %v1375
    %v1377 = vand.u32 %v112, 4294901760
    %1378 = vmatpush.msra.mxu0 %v1377
    %v1379 = vand.u32 %v111, 4294901760
    %1380 = vmatpush.msra.mxu0 %v1379
    %v1381 = vand.u32 %v110, 4294901760
    %1382 = vmatpush.msra.mxu0 %v1381
    %v1383 = vand.u32 %v109, 4294901760
    %1384 = vmatpush.msra.mxu0 %v1383
    %v1385 = vand.u32 %v108, 4294901760
    %1386 = vmatpush.msra.mxu0 %v1385
    %v1387 = vand.u32 %v107, 4294901760
    %1388 = vmatpush.msra.mxu0 %v1387
    %v1389 = vand.u32 %v106, 4294901760
    %1390 = vmatpush.msra.mxu0 %v1389
    %v1391 = vand.u32 %v105, 4294901760
    %1392 = vmatpush.msra.mxu0 %v1391
    %v1393 = vand.u32 %v104, 4294901760
    %1394 = vmatpush.msra.mxu0 %v1393
    %v1395 = vand.u32 %v103, 4294901760
    %1396 = vmatpush.msra.mxu0 %v1395
    %v1397 = vand.u32 %v102, 4294901760
    %1398 = vmatpush.msra.mxu0 %v1397
    %v1399 = vand.u32 %v101, 4294901760
    %1400 = vmatpush.msra.mxu0 %v1399
    %v1401 = vand.u32 %v100, 4294901760
    %1402 = vmatpush.msra.mxu0 %v1401
    %v1403 = vand.u32 %v99, 4294901760
    %1404 = vmatpush.msra.mxu0 %v1403
    %v1405 = vand.u32 %v98, 4294901760
    %1406 = vmatpush.msra.mxu0 %v1405
    %v1407 = vand.u32 %v46, 4294901760
    %v1408 = vsub.f32 %v46, %v1407
    %v1409 = vand.u32 %v1408, 4294901760
    %1410 = vmatmul.f32.gmra.mxu0 %v1409
    %v1411 = vpop.f32.mrf.mxu0
    %v1412 = vadd.f32 %v1373, %v1411
    %1413 = vdwg.mxu0
    %v1414 = vand.u32 %v113, 4294901760
    %v1415 = vsub.f32 %v113, %v1414
    %v1416 = vand.u32 %v1415, 4294901760
    %1417 = vmatpush.msra.mxu0 %v1416
    %v1418 = vand.u32 %v112, 4294901760
    %v1419 = vsub.f32 %v112, %v1418
    %v1420 = vand.u32 %v1419, 4294901760
    %1421 = vmatpush.msra.mxu0 %v1420
    %v1422 = vand.u32 %v111, 4294901760
    %v1423 = vsub.f32 %v111, %v1422
    %v1424 = vand.u32 %v1423, 4294901760
    %1425 = vmatpush.msra.mxu0 %v1424
    %v1426 = vand.u32 %v110, 4294901760
    %v1427 = vsub.f32 %v110, %v1426
    %v1428 = vand.u32 %v1427, 4294901760
    %1429 = vmatpush.msra.mxu0 %v1428
    %v1430 = vand.u32 %v109, 4294901760
    %v1431 = vsub.f32 %v109, %v1430
    %v1432 = vand.u32 %v1431, 4294901760
    %1433 = vmatpush.msra.mxu0 %v1432
    %v1434 = vand.u32 %v108, 4294901760
    %v1435 = vsub.f32 %v108, %v1434
    %v1436 = vand.u32 %v1435, 4294901760
    %1437 = vmatpush.msra.mxu0 %v1436
    %v1438 = vand.u32 %v107, 4294901760
    %v1439 = vsub.f32 %v107, %v1438
    %v1440 = vand.u32 %v1439, 4294901760
    %1441 = vmatpush.msra.mxu0 %v1440
    %v1442 = vand.u32 %v106, 4294901760
    %v1443 = vsub.f32 %v106, %v1442
    %v1444 = vand.u32 %v1443, 4294901760
    %1445 = vmatpush.msra.mxu0 %v1444
    %v1446 = vand.u32 %v105, 4294901760
    %v1447 = vsub.f32 %v105, %v1446
    %v1448 = vand.u32 %v1447, 4294901760
    %1449 = vmatpush.msra.mxu0 %v1448
    %v1450 = vand.u32 %v104, 4294901760
    %v1451 = vsub.f32 %v104, %v1450
    %v1452 = vand.u32 %v1451, 4294901760
    %1453 = vmatpush.msra.mxu0 %v1452
    %v1454 = vand.u32 %v103, 4294901760
    %v1455 = vsub.f32 %v103, %v1454
    %v1456 = vand.u32 %v1455, 4294901760
    %1457 = vmatpush.msra.mxu0 %v1456
    %v1458 = vand.u32 %v102, 4294901760
    %v1459 = vsub.f32 %v102, %v1458
    %v1460 = vand.u32 %v1459, 4294901760
    %1461 = vmatpush.msra.mxu0 %v1460
    %v1462 = vand.u32 %v101, 4294901760
    %v1463 = vsub.f32 %v101, %v1462
    %v1464 = vand.u32 %v1463, 4294901760
    %1465 = vmatpush.msra.mxu0 %v1464
    %v1466 = vand.u32 %v100, 4294901760
    %v1467 = vsub.f32 %v100, %v1466
    %v1468 = vand.u32 %v1467, 4294901760
    %1469 = vmatpush.msra.mxu0 %v1468
    %v1470 = vand.u32 %v99, 4294901760
    %v1471 = vsub.f32 %v99, %v1470
    %v1472 = vand.u32 %v1471, 4294901760
    %1473 = vmatpush.msra.mxu0 %v1472
    %v1474 = vand.u32 %v98, 4294901760
    %v1475 = vsub.f32 %v98, %v1474
    %v1476 = vand.u32 %v1475, 4294901760
    %1477 = vmatpush.msra.mxu0 %v1476
    %v1478 = vand.u32 %v46, 4294901760
    %1479 = vmatmul.f32.gmra.mxu0 %v1478
    %v1480 = vpop.f32.mrf.mxu0
    %v1481 = vadd.f32 %v1412, %v1480
    %1482 = vdwg.mxu0
    %v1483 = vand.u32 %v113, 4294901760
    %1484 = vmatpush.msra.mxu0 %v1483
    %v1485 = vand.u32 %v112, 4294901760
    %1486 = vmatpush.msra.mxu0 %v1485
    %v1487 = vand.u32 %v111, 4294901760
    %1488 = vmatpush.msra.mxu0 %v1487
    %v1489 = vand.u32 %v110, 4294901760
    %1490 = vmatpush.msra.mxu0 %v1489
    %v1491 = vand.u32 %v109, 4294901760
    %1492 = vmatpush.msra.mxu0 %v1491
    %v1493 = vand.u32 %v108, 4294901760
    %1494 = vmatpush.msra.mxu0 %v1493
    %v1495 = vand.u32 %v107, 4294901760
    %1496 = vmatpush.msra.mxu0 %v1495
    %v1497 = vand.u32 %v106, 4294901760
    %1498 = vmatpush.msra.mxu0 %v1497
    %v1499 = vand.u32 %v105, 4294901760
    %1500 = vmatpush.msra.mxu0 %v1499
    %v1501 = vand.u32 %v104, 4294901760
    %1502 = vmatpush.msra.mxu0 %v1501
    %v1503 = vand.u32 %v103, 4294901760
    %1504 = vmatpush.msra.mxu0 %v1503
    %v1505 = vand.u32 %v102, 4294901760
    %1506 = vmatpush.msra.mxu0 %v1505
    %v1507 = vand.u32 %v101, 4294901760
    %1508 = vmatpush.msra.mxu0 %v1507
    %v1509 = vand.u32 %v100, 4294901760
    %1510 = vmatpush.msra.mxu0 %v1509
    %v1511 = vand.u32 %v99, 4294901760
    %1512 = vmatpush.msra.mxu0 %v1511
    %v1513 = vand.u32 %v98, 4294901760
    %1514 = vmatpush.msra.mxu0 %v1513
    %v1515 = vand.u32 %v46, 4294901760
    %1516 = vmatmul.f32.gmra.mxu0 %v1515
    %v1517 = vpop.f32.mrf.mxu0
    %v1518 = vadd.f32 %v1481, %v1517
    %1519 = vdwg.mxu0
    %v1520 = vand.u32 %v129, 4294901760
    %1521 = vmatpush.msra.mxu0 %v1520
    %v1522 = vand.u32 %v128, 4294901760
    %1523 = vmatpush.msra.mxu0 %v1522
    %v1524 = vand.u32 %v127, 4294901760
    %1525 = vmatpush.msra.mxu0 %v1524
    %v1526 = vand.u32 %v126, 4294901760
    %1527 = vmatpush.msra.mxu0 %v1526
    %v1528 = vand.u32 %v125, 4294901760
    %1529 = vmatpush.msra.mxu0 %v1528
    %v1530 = vand.u32 %v124, 4294901760
    %1531 = vmatpush.msra.mxu0 %v1530
    %v1532 = vand.u32 %v123, 4294901760
    %1533 = vmatpush.msra.mxu0 %v1532
    %v1534 = vand.u32 %v122, 4294901760
    %1535 = vmatpush.msra.mxu0 %v1534
    %v1536 = vand.u32 %v121, 4294901760
    %1537 = vmatpush.msra.mxu0 %v1536
    %v1538 = vand.u32 %v120, 4294901760
    %1539 = vmatpush.msra.mxu0 %v1538
    %v1540 = vand.u32 %v119, 4294901760
    %1541 = vmatpush.msra.mxu0 %v1540
    %v1542 = vand.u32 %v118, 4294901760
    %1543 = vmatpush.msra.mxu0 %v1542
    %v1544 = vand.u32 %v117, 4294901760
    %1545 = vmatpush.msra.mxu0 %v1544
    %v1546 = vand.u32 %v116, 4294901760
    %1547 = vmatpush.msra.mxu0 %v1546
    %v1548 = vand.u32 %v115, 4294901760
    %1549 = vmatpush.msra.mxu0 %v1548
    %v1550 = vand.u32 %v114, 4294901760
    %1551 = vmatpush.msra.mxu0 %v1550
    %v1552 = vand.u32 %v47, 4294901760
    %v1553 = vsub.f32 %v47, %v1552
    %v1554 = vand.u32 %v1553, 4294901760
    %v1555 = vsub.f32 %v1553, %v1554
    %v1556 = vand.u32 %v1555, 4294901760
    %1557 = vmatmul.f32.gmra.mxu0 %v1556
    %v1558 = vpop.f32.mrf.mxu0
    %v1559 = vadd.f32 %v1518, %v1558
    %1560 = vdwg.mxu0
    %v1561 = vand.u32 %v129, 4294901760
    %v1562 = vsub.f32 %v129, %v1561
    %v1563 = vand.u32 %v1562, 4294901760
    %v1564 = vsub.f32 %v1562, %v1563
    %v1565 = vand.u32 %v1564, 4294901760
    %1566 = vmatpush.msra.mxu0 %v1565
    %v1567 = vand.u32 %v128, 4294901760
    %v1568 = vsub.f32 %v128, %v1567
    %v1569 = vand.u32 %v1568, 4294901760
    %v1570 = vsub.f32 %v1568, %v1569
    %v1571 = vand.u32 %v1570, 4294901760
    %1572 = vmatpush.msra.mxu0 %v1571
    %v1573 = vand.u32 %v127, 4294901760
    %v1574 = vsub.f32 %v127, %v1573
    %v1575 = vand.u32 %v1574, 4294901760
    %v1576 = vsub.f32 %v1574, %v1575
    %v1577 = vand.u32 %v1576, 4294901760
    %1578 = vmatpush.msra.mxu0 %v1577
    %v1579 = vand.u32 %v126, 4294901760
    %v1580 = vsub.f32 %v126, %v1579
    %v1581 = vand.u32 %v1580, 4294901760
    %v1582 = vsub.f32 %v1580, %v1581
    %v1583 = vand.u32 %v1582, 4294901760
    %1584 = vmatpush.msra.mxu0 %v1583
    %v1585 = vand.u32 %v125, 4294901760
    %v1586 = vsub.f32 %v125, %v1585
    %v1587 = vand.u32 %v1586, 4294901760
    %v1588 = vsub.f32 %v1586, %v1587
    %v1589 = vand.u32 %v1588, 4294901760
    %1590 = vmatpush.msra.mxu0 %v1589
    %v1591 = vand.u32 %v124, 4294901760
    %v1592 = vsub.f32 %v124, %v1591
    %v1593 = vand.u32 %v1592, 4294901760
    %v1594 = vsub.f32 %v1592, %v1593
    %v1595 = vand.u32 %v1594, 4294901760
    %1596 = vmatpush.msra.mxu0 %v1595
    %v1597 = vand.u32 %v123, 4294901760
    %v1598 = vsub.f32 %v123, %v1597
    %v1599 = vand.u32 %v1598, 4294901760
    %v1600 = vsub.f32 %v1598, %v1599
    %v1601 = vand.u32 %v1600, 4294901760
    %1602 = vmatpush.msra.mxu0 %v1601
    %v1603 = vand.u32 %v122, 4294901760
    %v1604 = vsub.f32 %v122, %v1603
    %v1605 = vand.u32 %v1604, 4294901760
    %v1606 = vsub.f32 %v1604, %v1605
    %v1607 = vand.u32 %v1606, 4294901760
    %1608 = vmatpush.msra.mxu0 %v1607
    %v1609 = vand.u32 %v121, 4294901760
    %v1610 = vsub.f32 %v121, %v1609
    %v1611 = vand.u32 %v1610, 4294901760
    %v1612 = vsub.f32 %v1610, %v1611
    %v1613 = vand.u32 %v1612, 4294901760
    %1614 = vmatpush.msra.mxu0 %v1613
    %v1615 = vand.u32 %v120, 4294901760
    %v1616 = vsub.f32 %v120, %v1615
    %v1617 = vand.u32 %v1616, 4294901760
    %v1618 = vsub.f32 %v1616, %v1617
    %v1619 = vand.u32 %v1618, 4294901760
    %1620 = vmatpush.msra.mxu0 %v1619
    %v1621 = vand.u32 %v119, 4294901760
    %v1622 = vsub.f32 %v119, %v1621
    %v1623 = vand.u32 %v1622, 4294901760
    %v1624 = vsub.f32 %v1622, %v1623
    %v1625 = vand.u32 %v1624, 4294901760
    %1626 = vmatpush.msra.mxu0 %v1625
    %v1627 = vand.u32 %v118, 4294901760
    %v1628 = vsub.f32 %v118, %v1627
    %v1629 = vand.u32 %v1628, 4294901760
    %v1630 = vsub.f32 %v1628, %v1629
    %v1631 = vand.u32 %v1630, 4294901760
    %1632 = vmatpush.msra.mxu0 %v1631
    %v1633 = vand.u32 %v117, 4294901760
    %v1634 = vsub.f32 %v117, %v1633
    %v1635 = vand.u32 %v1634, 4294901760
    %v1636 = vsub.f32 %v1634, %v1635
    %v1637 = vand.u32 %v1636, 4294901760
    %1638 = vmatpush.msra.mxu0 %v1637
    %v1639 = vand.u32 %v116, 4294901760
    %v1640 = vsub.f32 %v116, %v1639
    %v1641 = vand.u32 %v1640, 4294901760
    %v1642 = vsub.f32 %v1640, %v1641
    %v1643 = vand.u32 %v1642, 4294901760
    %1644 = vmatpush.msra.mxu0 %v1643
    %v1645 = vand.u32 %v115, 4294901760
    %v1646 = vsub.f32 %v115, %v1645
    %v1647 = vand.u32 %v1646, 4294901760
    %v1648 = vsub.f32 %v1646, %v1647
    %v1649 = vand.u32 %v1648, 4294901760
    %1650 = vmatpush.msra.mxu0 %v1649
    %v1651 = vand.u32 %v114, 4294901760
    %v1652 = vsub.f32 %v114, %v1651
    %v1653 = vand.u32 %v1652, 4294901760
    %v1654 = vsub.f32 %v1652, %v1653
    %v1655 = vand.u32 %v1654, 4294901760
    %1656 = vmatpush.msra.mxu0 %v1655
    %v1657 = vand.u32 %v47, 4294901760
    %1658 = vmatmul.f32.gmra.mxu0 %v1657
    %v1659 = vpop.f32.mrf.mxu0
    %v1660 = vadd.f32 %v1559, %v1659
    %1661 = vdwg.mxu0
    %v1662 = vand.u32 %v129, 4294901760
    %v1663 = vsub.f32 %v129, %v1662
    %1664 = vmatpush.msra.mxu0 %v1663
    %v1665 = vand.u32 %v128, 4294901760
    %v1666 = vsub.f32 %v128, %v1665
    %1667 = vmatpush.msra.mxu0 %v1666
    %v1668 = vand.u32 %v127, 4294901760
    %v1669 = vsub.f32 %v127, %v1668
    %1670 = vmatpush.msra.mxu0 %v1669
    %v1671 = vand.u32 %v126, 4294901760
    %v1672 = vsub.f32 %v126, %v1671
    %1673 = vmatpush.msra.mxu0 %v1672
    %v1674 = vand.u32 %v125, 4294901760
    %v1675 = vsub.f32 %v125, %v1674
    %1676 = vmatpush.msra.mxu0 %v1675
    %v1677 = vand.u32 %v124, 4294901760
    %v1678 = vsub.f32 %v124, %v1677
    %1679 = vmatpush.msra.mxu0 %v1678
    %v1680 = vand.u32 %v123, 4294901760
    %v1681 = vsub.f32 %v123, %v1680
    %1682 = vmatpush.msra.mxu0 %v1681
    %v1683 = vand.u32 %v122, 4294901760
    %v1684 = vsub.f32 %v122, %v1683
    %1685 = vmatpush.msra.mxu0 %v1684
    %v1686 = vand.u32 %v121, 4294901760
    %v1687 = vsub.f32 %v121, %v1686
    %1688 = vmatpush.msra.mxu0 %v1687
    %v1689 = vand.u32 %v120, 4294901760
    %v1690 = vsub.f32 %v120, %v1689
    %1691 = vmatpush.msra.mxu0 %v1690
    %v1692 = vand.u32 %v119, 4294901760
    %v1693 = vsub.f32 %v119, %v1692
    %1694 = vmatpush.msra.mxu0 %v1693
    %v1695 = vand.u32 %v118, 4294901760
    %v1696 = vsub.f32 %v118, %v1695
    %1697 = vmatpush.msra.mxu0 %v1696
    %v1698 = vand.u32 %v117, 4294901760
    %v1699 = vsub.f32 %v117, %v1698
    %1700 = vmatpush.msra.mxu0 %v1699
    %v1701 = vand.u32 %v116, 4294901760
    %v1702 = vsub.f32 %v116, %v1701
    %1703 = vmatpush.msra.mxu0 %v1702
    %v1704 = vand.u32 %v115, 4294901760
    %v1705 = vsub.f32 %v115, %v1704
    %1706 = vmatpush.msra.mxu0 %v1705
    %v1707 = vand.u32 %v114, 4294901760
    %v1708 = vsub.f32 %v114, %v1707
    %1709 = vmatpush.msra.mxu0 %v1708
    %v1710 = vand.u32 %v47, 4294901760
    %v1711 = vsub.f32 %v47, %v1710
    %1712 = vmatmul.f32.gmra.mxu0 %v1711
    %v1713 = vpop.f32.mrf.mxu0
    %v1714 = vadd.f32 %v1660, %v1713
    %1715 = vdwg.mxu0
    %v1716 = vand.u32 %v129, 4294901760
    %1717 = vmatpush.msra.mxu0 %v1716
    %v1718 = vand.u32 %v128, 4294901760
    %1719 = vmatpush.msra.mxu0 %v1718
    %v1720 = vand.u32 %v127, 4294901760
    %1721 = vmatpush.msra.mxu0 %v1720
    %v1722 = vand.u32 %v126, 4294901760
    %1723 = vmatpush.msra.mxu0 %v1722
    %v1724 = vand.u32 %v125, 4294901760
    %1725 = vmatpush.msra.mxu0 %v1724
    %v1726 = vand.u32 %v124, 4294901760
    %1727 = vmatpush.msra.mxu0 %v1726
    %v1728 = vand.u32 %v123, 4294901760
    %1729 = vmatpush.msra.mxu0 %v1728
    %v1730 = vand.u32 %v122, 4294901760
    %1731 = vmatpush.msra.mxu0 %v1730
    %v1732 = vand.u32 %v121, 4294901760
    %1733 = vmatpush.msra.mxu0 %v1732
    %v1734 = vand.u32 %v120, 4294901760
    %1735 = vmatpush.msra.mxu0 %v1734
    %v1736 = vand.u32 %v119, 4294901760
    %1737 = vmatpush.msra.mxu0 %v1736
    %v1738 = vand.u32 %v118, 4294901760
    %1739 = vmatpush.msra.mxu0 %v1738
    %v1740 = vand.u32 %v117, 4294901760
    %1741 = vmatpush.msra.mxu0 %v1740
    %v1742 = vand.u32 %v116, 4294901760
    %1743 = vmatpush.msra.mxu0 %v1742
    %v1744 = vand.u32 %v115, 4294901760
    %1745 = vmatpush.msra.mxu0 %v1744
    %v1746 = vand.u32 %v114, 4294901760
    %1747 = vmatpush.msra.mxu0 %v1746
    %v1748 = vand.u32 %v47, 4294901760
    %v1749 = vsub.f32 %v47, %v1748
    %v1750 = vand.u32 %v1749, 4294901760
    %1751 = vmatmul.f32.gmra.mxu0 %v1750
    %v1752 = vpop.f32.mrf.mxu0
    %v1753 = vadd.f32 %v1714, %v1752
    %1754 = vdwg.mxu0
    %v1755 = vand.u32 %v129, 4294901760
    %v1756 = vsub.f32 %v129, %v1755
    %v1757 = vand.u32 %v1756, 4294901760
    %1758 = vmatpush.msra.mxu0 %v1757
    %v1759 = vand.u32 %v128, 4294901760
    %v1760 = vsub.f32 %v128, %v1759
    %v1761 = vand.u32 %v1760, 4294901760
    %1762 = vmatpush.msra.mxu0 %v1761
    %v1763 = vand.u32 %v127, 4294901760
    %v1764 = vsub.f32 %v127, %v1763
    %v1765 = vand.u32 %v1764, 4294901760
    %1766 = vmatpush.msra.mxu0 %v1765
    %v1767 = vand.u32 %v126, 4294901760
    %v1768 = vsub.f32 %v126, %v1767
    %v1769 = vand.u32 %v1768, 4294901760
    %1770 = vmatpush.msra.mxu0 %v1769
    %v1771 = vand.u32 %v125, 4294901760
    %v1772 = vsub.f32 %v125, %v1771
    %v1773 = vand.u32 %v1772, 4294901760
    %1774 = vmatpush.msra.mxu0 %v1773
    %v1775 = vand.u32 %v124, 4294901760
    %v1776 = vsub.f32 %v124, %v1775
    %v1777 = vand.u32 %v1776, 4294901760
    %1778 = vmatpush.msra.mxu0 %v1777
    %v1779 = vand.u32 %v123, 4294901760
    %v1780 = vsub.f32 %v123, %v1779
    %v1781 = vand.u32 %v1780, 4294901760
    %1782 = vmatpush.msra.mxu0 %v1781
    %v1783 = vand.u32 %v122, 4294901760
    %v1784 = vsub.f32 %v122, %v1783
    %v1785 = vand.u32 %v1784, 4294901760
    %1786 = vmatpush.msra.mxu0 %v1785
    %v1787 = vand.u32 %v121, 4294901760
    %v1788 = vsub.f32 %v121, %v1787
    %v1789 = vand.u32 %v1788, 4294901760
    %1790 = vmatpush.msra.mxu0 %v1789
    %v1791 = vand.u32 %v120, 4294901760
    %v1792 = vsub.f32 %v120, %v1791
    %v1793 = vand.u32 %v1792, 4294901760
    %1794 = vmatpush.msra.mxu0 %v1793
    %v1795 = vand.u32 %v119, 4294901760
    %v1796 = vsub.f32 %v119, %v1795
    %v1797 = vand.u32 %v1796, 4294901760
    %1798 = vmatpush.msra.mxu0 %v1797
    %v1799 = vand.u32 %v118, 4294901760
    %v1800 = vsub.f32 %v118, %v1799
    %v1801 = vand.u32 %v1800, 4294901760
    %1802 = vmatpush.msra.mxu0 %v1801
    %v1803 = vand.u32 %v117, 4294901760
    %v1804 = vsub.f32 %v117, %v1803
    %v1805 = vand.u32 %v1804, 4294901760
    %1806 = vmatpush.msra.mxu0 %v1805
    %v1807 = vand.u32 %v116, 4294901760
    %v1808 = vsub.f32 %v116, %v1807
    %v1809 = vand.u32 %v1808, 4294901760
    %1810 = vmatpush.msra.mxu0 %v1809
    %v1811 = vand.u32 %v115, 4294901760
    %v1812 = vsub.f32 %v115, %v1811
    %v1813 = vand.u32 %v1812, 4294901760
    %1814 = vmatpush.msra.mxu0 %v1813
    %v1815 = vand.u32 %v114, 4294901760
    %v1816 = vsub.f32 %v114, %v1815
    %v1817 = vand.u32 %v1816, 4294901760
    %1818 = vmatpush.msra.mxu0 %v1817
    %v1819 = vand.u32 %v47, 4294901760
    %1820 = vmatmul.f32.gmra.mxu0 %v1819
    %v1821 = vpop.f32.mrf.mxu0
    %v1822 = vadd.f32 %v1753, %v1821
    %1823 = vdwg.mxu0
    %v1824 = vand.u32 %v129, 4294901760
    %1825 = vmatpush.msra.mxu0 %v1824
    %v1826 = vand.u32 %v128, 4294901760
    %1827 = vmatpush.msra.mxu0 %v1826
    %v1828 = vand.u32 %v127, 4294901760
    %1829 = vmatpush.msra.mxu0 %v1828
    %v1830 = vand.u32 %v126, 4294901760
    %1831 = vmatpush.msra.mxu0 %v1830
    %v1832 = vand.u32 %v125, 4294901760
    %1833 = vmatpush.msra.mxu0 %v1832
    %v1834 = vand.u32 %v124, 4294901760
    %1835 = vmatpush.msra.mxu0 %v1834
    %v1836 = vand.u32 %v123, 4294901760
    %1837 = vmatpush.msra.mxu0 %v1836
    %v1838 = vand.u32 %v122, 4294901760
    %1839 = vmatpush.msra.mxu0 %v1838
    %v1840 = vand.u32 %v121, 4294901760
    %1841 = vmatpush.msra.mxu0 %v1840
    %v1842 = vand.u32 %v120, 4294901760
    %1843 = vmatpush.msra.mxu0 %v1842
    %v1844 = vand.u32 %v119, 4294901760
    %1845 = vmatpush.msra.mxu0 %v1844
    %v1846 = vand.u32 %v118, 4294901760
    %1847 = vmatpush.msra.mxu0 %v1846
    %v1848 = vand.u32 %v117, 4294901760
    %1849 = vmatpush.msra.mxu0 %v1848
    %v1850 = vand.u32 %v116, 4294901760
    %1851 = vmatpush.msra.mxu0 %v1850
    %v1852 = vand.u32 %v115, 4294901760
    %1853 = vmatpush.msra.mxu0 %v1852
    %v1854 = vand.u32 %v114, 4294901760
    %1855 = vmatpush.msra.mxu0 %v1854
    %v1856 = vand.u32 %v47, 4294901760
    %1857 = vmatmul.f32.gmra.mxu0 %v1856
    %v1858 = vpop.f32.mrf.mxu0
    %v1859 = vadd.f32 %v1822, %v1858
    %1860 = vdwg.mxu0
    %v1861 = vand.u32 %v145, 4294901760
    %1862 = vmatpush.msra.mxu0 %v1861
    %v1863 = vand.u32 %v144, 4294901760
    %1864 = vmatpush.msra.mxu0 %v1863
    %v1865 = vand.u32 %v143, 4294901760
    %1866 = vmatpush.msra.mxu0 %v1865
    %v1867 = vand.u32 %v142, 4294901760
    %1868 = vmatpush.msra.mxu0 %v1867
    %v1869 = vand.u32 %v141, 4294901760
    %1870 = vmatpush.msra.mxu0 %v1869
    %v1871 = vand.u32 %v140, 4294901760
    %1872 = vmatpush.msra.mxu0 %v1871
    %v1873 = vand.u32 %v139, 4294901760
    %1874 = vmatpush.msra.mxu0 %v1873
    %v1875 = vand.u32 %v138, 4294901760
    %1876 = vmatpush.msra.mxu0 %v1875
    %v1877 = vand.u32 %v137, 4294901760
    %1878 = vmatpush.msra.mxu0 %v1877
    %v1879 = vand.u32 %v136, 4294901760
    %1880 = vmatpush.msra.mxu0 %v1879
    %v1881 = vand.u32 %v135, 4294901760
    %1882 = vmatpush.msra.mxu0 %v1881
    %v1883 = vand.u32 %v134, 4294901760
    %1884 = vmatpush.msra.mxu0 %v1883
    %v1885 = vand.u32 %v133, 4294901760
    %1886 = vmatpush.msra.mxu0 %v1885
    %v1887 = vand.u32 %v132, 4294901760
    %1888 = vmatpush.msra.mxu0 %v1887
    %v1889 = vand.u32 %v131, 4294901760
    %1890 = vmatpush.msra.mxu0 %v1889
    %v1891 = vand.u32 %v130, 4294901760
    %1892 = vmatpush.msra.mxu0 %v1891
    %v1893 = vand.u32 %v48, 4294901760
    %v1894 = vsub.f32 %v48, %v1893
    %v1895 = vand.u32 %v1894, 4294901760
    %v1896 = vsub.f32 %v1894, %v1895
    %v1897 = vand.u32 %v1896, 4294901760
    %1898 = vmatmul.f32.gmra.mxu0 %v1897
    %v1899 = vpop.f32.mrf.mxu0
    %v1900 = vadd.f32 %v1859, %v1899
    %1901 = vdwg.mxu0
    %v1902 = vand.u32 %v145, 4294901760
    %v1903 = vsub.f32 %v145, %v1902
    %v1904 = vand.u32 %v1903, 4294901760
    %v1905 = vsub.f32 %v1903, %v1904
    %v1906 = vand.u32 %v1905, 4294901760
    %1907 = vmatpush.msra.mxu0 %v1906
    %v1908 = vand.u32 %v144, 4294901760
    %v1909 = vsub.f32 %v144, %v1908
    %v1910 = vand.u32 %v1909, 4294901760
    %v1911 = vsub.f32 %v1909, %v1910
    %v1912 = vand.u32 %v1911, 4294901760
    %1913 = vmatpush.msra.mxu0 %v1912
    %v1914 = vand.u32 %v143, 4294901760
    %v1915 = vsub.f32 %v143, %v1914
    %v1916 = vand.u32 %v1915, 4294901760
    %v1917 = vsub.f32 %v1915, %v1916
    %v1918 = vand.u32 %v1917, 4294901760
    %1919 = vmatpush.msra.mxu0 %v1918
    %v1920 = vand.u32 %v142, 4294901760
    %v1921 = vsub.f32 %v142, %v1920
    %v1922 = vand.u32 %v1921, 4294901760
    %v1923 = vsub.f32 %v1921, %v1922
    %v1924 = vand.u32 %v1923, 4294901760
    %1925 = vmatpush.msra.mxu0 %v1924
    %v1926 = vand.u32 %v141, 4294901760
    %v1927 = vsub.f32 %v141, %v1926
    %v1928 = vand.u32 %v1927, 4294901760
    %v1929 = vsub.f32 %v1927, %v1928
    %v1930 = vand.u32 %v1929, 4294901760
    %1931 = vmatpush.msra.mxu0 %v1930
    %v1932 = vand.u32 %v140, 4294901760
    %v1933 = vsub.f32 %v140, %v1932
    %v1934 = vand.u32 %v1933, 4294901760
    %v1935 = vsub.f32 %v1933, %v1934
    %v1936 = vand.u32 %v1935, 4294901760
    %1937 = vmatpush.msra.mxu0 %v1936
    %v1938 = vand.u32 %v139, 4294901760
    %v1939 = vsub.f32 %v139, %v1938
    %v1940 = vand.u32 %v1939, 4294901760
    %v1941 = vsub.f32 %v1939, %v1940
    %v1942 = vand.u32 %v1941, 4294901760
    %1943 = vmatpush.msra.mxu0 %v1942
    %v1944 = vand.u32 %v138, 4294901760
    %v1945 = vsub.f32 %v138, %v1944
    %v1946 = vand.u32 %v1945, 4294901760
    %v1947 = vsub.f32 %v1945, %v1946
    %v1948 = vand.u32 %v1947, 4294901760
    %1949 = vmatpush.msra.mxu0 %v1948
    %v1950 = vand.u32 %v137, 4294901760
    %v1951 = vsub.f32 %v137, %v1950
    %v1952 = vand.u32 %v1951, 4294901760
    %v1953 = vsub.f32 %v1951, %v1952
    %v1954 = vand.u32 %v1953, 4294901760
    %1955 = vmatpush.msra.mxu0 %v1954
    %v1956 = vand.u32 %v136, 4294901760
    %v1957 = vsub.f32 %v136, %v1956
    %v1958 = vand.u32 %v1957, 4294901760
    %v1959 = vsub.f32 %v1957, %v1958
    %v1960 = vand.u32 %v1959, 4294901760
    %1961 = vmatpush.msra.mxu0 %v1960
    %v1962 = vand.u32 %v135, 4294901760
    %v1963 = vsub.f32 %v135, %v1962
    %v1964 = vand.u32 %v1963, 4294901760
    %v1965 = vsub.f32 %v1963, %v1964
    %v1966 = vand.u32 %v1965, 4294901760
    %1967 = vmatpush.msra.mxu0 %v1966
    %v1968 = vand.u32 %v134, 4294901760
    %v1969 = vsub.f32 %v134, %v1968
    %v1970 = vand.u32 %v1969, 4294901760
    %v1971 = vsub.f32 %v1969, %v1970
    %v1972 = vand.u32 %v1971, 4294901760
    %1973 = vmatpush.msra.mxu0 %v1972
    %v1974 = vand.u32 %v133, 4294901760
    %v1975 = vsub.f32 %v133, %v1974
    %v1976 = vand.u32 %v1975, 4294901760
    %v1977 = vsub.f32 %v1975, %v1976
    %v1978 = vand.u32 %v1977, 4294901760
    %1979 = vmatpush.msra.mxu0 %v1978
    %v1980 = vand.u32 %v132, 4294901760
    %v1981 = vsub.f32 %v132, %v1980
    %v1982 = vand.u32 %v1981, 4294901760
    %v1983 = vsub.f32 %v1981, %v1982
    %v1984 = vand.u32 %v1983, 4294901760
    %1985 = vmatpush.msra.mxu0 %v1984
    %v1986 = vand.u32 %v131, 4294901760
    %v1987 = vsub.f32 %v131, %v1986
    %v1988 = vand.u32 %v1987, 4294901760
    %v1989 = vsub.f32 %v1987, %v1988
    %v1990 = vand.u32 %v1989, 4294901760
    %1991 = vmatpush.msra.mxu0 %v1990
    %v1992 = vand.u32 %v130, 4294901760
    %v1993 = vsub.f32 %v130, %v1992
    %v1994 = vand.u32 %v1993, 4294901760
    %v1995 = vsub.f32 %v1993, %v1994
    %v1996 = vand.u32 %v1995, 4294901760
    %1997 = vmatpush.msra.mxu0 %v1996
    %v1998 = vand.u32 %v48, 4294901760
    %1999 = vmatmul.f32.gmra.mxu0 %v1998
    %v2000 = vpop.f32.mrf.mxu0
    %v2001 = vadd.f32 %v1900, %v2000
    %2002 = vdwg.mxu0
    %v2003 = vand.u32 %v145, 4294901760
    %v2004 = vsub.f32 %v145, %v2003
    %2005 = vmatpush.msra.mxu0 %v2004
    %v2006 = vand.u32 %v144, 4294901760
    %v2007 = vsub.f32 %v144, %v2006
    %2008 = vmatpush.msra.mxu0 %v2007
    %v2009 = vand.u32 %v143, 4294901760
    %v2010 = vsub.f32 %v143, %v2009
    %2011 = vmatpush.msra.mxu0 %v2010
    %v2012 = vand.u32 %v142, 4294901760
    %v2013 = vsub.f32 %v142, %v2012
    %2014 = vmatpush.msra.mxu0 %v2013
    %v2015 = vand.u32 %v141, 4294901760
    %v2016 = vsub.f32 %v141, %v2015
    %2017 = vmatpush.msra.mxu0 %v2016
    %v2018 = vand.u32 %v140, 4294901760
    %v2019 = vsub.f32 %v140, %v2018
    %2020 = vmatpush.msra.mxu0 %v2019
    %v2021 = vand.u32 %v139, 4294901760
    %v2022 = vsub.f32 %v139, %v2021
    %2023 = vmatpush.msra.mxu0 %v2022
    %v2024 = vand.u32 %v138, 4294901760
    %v2025 = vsub.f32 %v138, %v2024
    %2026 = vmatpush.msra.mxu0 %v2025
    %v2027 = vand.u32 %v137, 4294901760
    %v2028 = vsub.f32 %v137, %v2027
    %2029 = vmatpush.msra.mxu0 %v2028
    %v2030 = vand.u32 %v136, 4294901760
    %v2031 = vsub.f32 %v136, %v2030
    %2032 = vmatpush.msra.mxu0 %v2031
    %v2033 = vand.u32 %v135, 4294901760
    %v2034 = vsub.f32 %v135, %v2033
    %2035 = vmatpush.msra.mxu0 %v2034
    %v2036 = vand.u32 %v134, 4294901760
    %v2037 = vsub.f32 %v134, %v2036
    %2038 = vmatpush.msra.mxu0 %v2037
    %v2039 = vand.u32 %v133, 4294901760
    %v2040 = vsub.f32 %v133, %v2039
    %2041 = vmatpush.msra.mxu0 %v2040
    %v2042 = vand.u32 %v132, 4294901760
    %v2043 = vsub.f32 %v132, %v2042
    %2044 = vmatpush.msra.mxu0 %v2043
    %v2045 = vand.u32 %v131, 4294901760
    %v2046 = vsub.f32 %v131, %v2045
    %2047 = vmatpush.msra.mxu0 %v2046
    %v2048 = vand.u32 %v130, 4294901760
    %v2049 = vsub.f32 %v130, %v2048
    %2050 = vmatpush.msra.mxu0 %v2049
    %v2051 = vand.u32 %v48, 4294901760
    %v2052 = vsub.f32 %v48, %v2051
    %2053 = vmatmul.f32.gmra.mxu0 %v2052
    %v2054 = vpop.f32.mrf.mxu0
    %v2055 = vadd.f32 %v2001, %v2054
    %2056 = vdwg.mxu0
    %v2057 = vand.u32 %v145, 4294901760
    %2058 = vmatpush.msra.mxu0 %v2057
    %v2059 = vand.u32 %v144, 4294901760
    %2060 = vmatpush.msra.mxu0 %v2059
    %v2061 = vand.u32 %v143, 4294901760
    %2062 = vmatpush.msra.mxu0 %v2061
    %v2063 = vand.u32 %v142, 4294901760
    %2064 = vmatpush.msra.mxu0 %v2063
    %v2065 = vand.u32 %v141, 4294901760
    %2066 = vmatpush.msra.mxu0 %v2065
    %v2067 = vand.u32 %v140, 4294901760
    %2068 = vmatpush.msra.mxu0 %v2067
    %v2069 = vand.u32 %v139, 4294901760
    %2070 = vmatpush.msra.mxu0 %v2069
    %v2071 = vand.u32 %v138, 4294901760
    %2072 = vmatpush.msra.mxu0 %v2071
    %v2073 = vand.u32 %v137, 4294901760
    %2074 = vmatpush.msra.mxu0 %v2073
    %v2075 = vand.u32 %v136, 4294901760
    %2076 = vmatpush.msra.mxu0 %v2075
    %v2077 = vand.u32 %v135, 4294901760
    %2078 = vmatpush.msra.mxu0 %v2077
    %v2079 = vand.u32 %v134, 4294901760
    %2080 = vmatpush.msra.mxu0 %v2079
    %v2081 = vand.u32 %v133, 4294901760
    %2082 = vmatpush.msra.mxu0 %v2081
    %v2083 = vand.u32 %v132, 4294901760
    %2084 = vmatpush.msra.mxu0 %v2083
    %v2085 = vand.u32 %v131, 4294901760
    %2086 = vmatpush.msra.mxu0 %v2085
    %v2087 = vand.u32 %v130, 4294901760
    %2088 = vmatpush.msra.mxu0 %v2087
    %v2089 = vand.u32 %v48, 4294901760
    %v2090 = vsub.f32 %v48, %v2089
    %v2091 = vand.u32 %v2090, 4294901760
    %2092 = vmatmul.f32.gmra.mxu0 %v2091
    %v2093 = vpop.f32.mrf.mxu0
    %v2094 = vadd.f32 %v2055, %v2093
    %2095 = vdwg.mxu0
    %v2096 = vand.u32 %v145, 4294901760
    %v2097 = vsub.f32 %v145, %v2096
    %v2098 = vand.u32 %v2097, 4294901760
    %2099 = vmatpush.msra.mxu0 %v2098
    %v2100 = vand.u32 %v144, 4294901760
    %v2101 = vsub.f32 %v144, %v2100
    %v2102 = vand.u32 %v2101, 4294901760
    %2103 = vmatpush.msra.mxu0 %v2102
    %v2104 = vand.u32 %v143, 4294901760
    %v2105 = vsub.f32 %v143, %v2104
    %v2106 = vand.u32 %v2105, 4294901760
    %2107 = vmatpush.msra.mxu0 %v2106
    %v2108 = vand.u32 %v142, 4294901760
    %v2109 = vsub.f32 %v142, %v2108
    %v2110 = vand.u32 %v2109, 4294901760
    %2111 = vmatpush.msra.mxu0 %v2110
    %v2112 = vand.u32 %v141, 4294901760
    %v2113 = vsub.f32 %v141, %v2112
    %v2114 = vand.u32 %v2113, 4294901760
    %2115 = vmatpush.msra.mxu0 %v2114
    %v2116 = vand.u32 %v140, 4294901760
    %v2117 = vsub.f32 %v140, %v2116
    %v2118 = vand.u32 %v2117, 4294901760
    %2119 = vmatpush.msra.mxu0 %v2118
    %v2120 = vand.u32 %v139, 4294901760
    %v2121 = vsub.f32 %v139, %v2120
    %v2122 = vand.u32 %v2121, 4294901760
    %2123 = vmatpush.msra.mxu0 %v2122
    %v2124 = vand.u32 %v138, 4294901760
    %v2125 = vsub.f32 %v138, %v2124
    %v2126 = vand.u32 %v2125, 4294901760
    %2127 = vmatpush.msra.mxu0 %v2126
    %v2128 = vand.u32 %v137, 4294901760
    %v2129 = vsub.f32 %v137, %v2128
    %v2130 = vand.u32 %v2129, 4294901760
    %2131 = vmatpush.msra.mxu0 %v2130
    %v2132 = vand.u32 %v136, 4294901760
    %v2133 = vsub.f32 %v136, %v2132
    %v2134 = vand.u32 %v2133, 4294901760
    %2135 = vmatpush.msra.mxu0 %v2134
    %v2136 = vand.u32 %v135, 4294901760
    %v2137 = vsub.f32 %v135, %v2136
    %v2138 = vand.u32 %v2137, 4294901760
    %2139 = vmatpush.msra.mxu0 %v2138
    %v2140 = vand.u32 %v134, 4294901760
    %v2141 = vsub.f32 %v134, %v2140
    %v2142 = vand.u32 %v2141, 4294901760
    %2143 = vmatpush.msra.mxu0 %v2142
    %v2144 = vand.u32 %v133, 4294901760
    %v2145 = vsub.f32 %v133, %v2144
    %v2146 = vand.u32 %v2145, 4294901760
    %2147 = vmatpush.msra.mxu0 %v2146
    %v2148 = vand.u32 %v132, 4294901760
    %v2149 = vsub.f32 %v132, %v2148
    %v2150 = vand.u32 %v2149, 4294901760
    %2151 = vmatpush.msra.mxu0 %v2150
    %v2152 = vand.u32 %v131, 4294901760
    %v2153 = vsub.f32 %v131, %v2152
    %v2154 = vand.u32 %v2153, 4294901760
    %2155 = vmatpush.msra.mxu0 %v2154
    %v2156 = vand.u32 %v130, 4294901760
    %v2157 = vsub.f32 %v130, %v2156
    %v2158 = vand.u32 %v2157, 4294901760
    %2159 = vmatpush.msra.mxu0 %v2158
    %v2160 = vand.u32 %v48, 4294901760
    %2161 = vmatmul.f32.gmra.mxu0 %v2160
    %v2162 = vpop.f32.mrf.mxu0
    %v2163 = vadd.f32 %v2094, %v2162
    %2164 = vdwg.mxu0
    %v2165 = vand.u32 %v145, 4294901760
    %2166 = vmatpush.msra.mxu0 %v2165
    %v2167 = vand.u32 %v144, 4294901760
    %2168 = vmatpush.msra.mxu0 %v2167
    %v2169 = vand.u32 %v143, 4294901760
    %2170 = vmatpush.msra.mxu0 %v2169
    %v2171 = vand.u32 %v142, 4294901760
    %2172 = vmatpush.msra.mxu0 %v2171
    %v2173 = vand.u32 %v141, 4294901760
    %2174 = vmatpush.msra.mxu0 %v2173
    %v2175 = vand.u32 %v140, 4294901760
    %2176 = vmatpush.msra.mxu0 %v2175
    %v2177 = vand.u32 %v139, 4294901760
    %2178 = vmatpush.msra.mxu0 %v2177
    %v2179 = vand.u32 %v138, 4294901760
    %2180 = vmatpush.msra.mxu0 %v2179
    %v2181 = vand.u32 %v137, 4294901760
    %2182 = vmatpush.msra.mxu0 %v2181
    %v2183 = vand.u32 %v136, 4294901760
    %2184 = vmatpush.msra.mxu0 %v2183
    %v2185 = vand.u32 %v135, 4294901760
    %2186 = vmatpush.msra.mxu0 %v2185
    %v2187 = vand.u32 %v134, 4294901760
    %2188 = vmatpush.msra.mxu0 %v2187
    %v2189 = vand.u32 %v133, 4294901760
    %2190 = vmatpush.msra.mxu0 %v2189
    %v2191 = vand.u32 %v132, 4294901760
    %2192 = vmatpush.msra.mxu0 %v2191
    %v2193 = vand.u32 %v131, 4294901760
    %2194 = vmatpush.msra.mxu0 %v2193
    %v2195 = vand.u32 %v130, 4294901760
    %2196 = vmatpush.msra.mxu0 %v2195
    %v2197 = vand.u32 %v48, 4294901760
    %2198 = vmatmul.f32.gmra.mxu0 %v2197
    %v2199 = vpop.f32.mrf.mxu0
    %v2200 = vadd.f32 %v2163, %v2199
    %2201 = vdwg.mxu0
    %2202 = vmatpush.msra.mxu0 0.0
    %2203 = vmatpush.msra.mxu0 0.0
    %2204 = vmatpush.msra.mxu0 0.0
    %2205 = vmatpush.msra.mxu0 0.0
    %2206 = vmatpush.msra.mxu0 0.0
    %2207 = vmatpush.msra.mxu0 0.0
    %2208 = vmatpush.msra.mxu0 0.0
    %2209 = vmatpush.msra.mxu0 0.0
    %2210 = vmatpush.msra.mxu0 0.0
    %2211 = vmatpush.msra.mxu0 0.0
    %2212 = vmatpush.msra.mxu0 0.0
    %2213 = vmatpush.msra.mxu0 0.0
    %2214 = vmatpush.msra.mxu0 0.0
    %2215 = vmatpush.msra.mxu0 0.0
    %v2216 = vand.u32 %v147, 4294901760
    %2217 = vmatpush.msra.mxu0 %v2216
    %v2218 = vand.u32 %v146, 4294901760
    %2219 = vmatpush.msra.mxu0 %v2218
    %v2220 = vand.u32 %v154, 4294901760
    %v2221 = vsub.f32 %v154, %v2220
    %v2222 = vand.u32 %v2221, 4294901760
    %v2223 = vsub.f32 %v2221, %v2222
    %v2224 = vand.u32 %v2223, 4294901760
    %2225 = vmatmul.f32.gmra.mxu0 %v2224
    %v2226 = vpop.f32.mrf.mxu0
    %v2227 = vadd.f32 %v2200, %v2226
    %2228 = vdwg.mxu0
    %2229 = vmatpush.msra.mxu0 0.0
    %2230 = vmatpush.msra.mxu0 0.0
    %2231 = vmatpush.msra.mxu0 0.0
    %2232 = vmatpush.msra.mxu0 0.0
    %2233 = vmatpush.msra.mxu0 0.0
    %2234 = vmatpush.msra.mxu0 0.0
    %2235 = vmatpush.msra.mxu0 0.0
    %2236 = vmatpush.msra.mxu0 0.0
    %2237 = vmatpush.msra.mxu0 0.0
    %2238 = vmatpush.msra.mxu0 0.0
    %2239 = vmatpush.msra.mxu0 0.0
    %2240 = vmatpush.msra.mxu0 0.0
    %2241 = vmatpush.msra.mxu0 0.0
    %2242 = vmatpush.msra.mxu0 0.0
    %v2243 = vand.u32 %v147, 4294901760
    %v2244 = vsub.f32 %v147, %v2243
    %v2245 = vand.u32 %v2244, 4294901760
    %v2246 = vsub.f32 %v2244, %v2245
    %v2247 = vand.u32 %v2246, 4294901760
    %2248 = vmatpush.msra.mxu0 %v2247
    %v2249 = vand.u32 %v146, 4294901760
    %v2250 = vsub.f32 %v146, %v2249
    %v2251 = vand.u32 %v2250, 4294901760
    %v2252 = vsub.f32 %v2250, %v2251
    %v2253 = vand.u32 %v2252, 4294901760
    %2254 = vmatpush.msra.mxu0 %v2253
    %v2255 = vand.u32 %v154, 4294901760
    %2256 = vmatmul.f32.gmra.mxu0 %v2255
    %v2257 = vpop.f32.mrf.mxu0
    %v2258 = vadd.f32 %v2227, %v2257
    %2259 = vdwg.mxu0
    %2260 = vmatpush.msra.mxu0 0.0
    %2261 = vmatpush.msra.mxu0 0.0
    %2262 = vmatpush.msra.mxu0 0.0
    %2263 = vmatpush.msra.mxu0 0.0
    %2264 = vmatpush.msra.mxu0 0.0
    %2265 = vmatpush.msra.mxu0 0.0
    %2266 = vmatpush.msra.mxu0 0.0
    %2267 = vmatpush.msra.mxu0 0.0
    %2268 = vmatpush.msra.mxu0 0.0
    %2269 = vmatpush.msra.mxu0 0.0
    %2270 = vmatpush.msra.mxu0 0.0
    %2271 = vmatpush.msra.mxu0 0.0
    %2272 = vmatpush.msra.mxu0 0.0
    %2273 = vmatpush.msra.mxu0 0.0
    %v2274 = vand.u32 %v147, 4294901760
    %v2275 = vsub.f32 %v147, %v2274
    %2276 = vmatpush.msra.mxu0 %v2275
    %v2277 = vand.u32 %v146, 4294901760
    %v2278 = vsub.f32 %v146, %v2277
    %2279 = vmatpush.msra.mxu0 %v2278
    %v2280 = vand.u32 %v154, 4294901760
    %v2281 = vsub.f32 %v154, %v2280
    %2282 = vmatmul.f32.gmra.mxu0 %v2281
    %v2283 = vpop.f32.mrf.mxu0
    %v2284 = vadd.f32 %v2258, %v2283
    %2285 = vdwg.mxu0
    %2286 = vmatpush.msra.mxu0 0.0
    %2287 = vmatpush.msra.mxu0 0.0
    %2288 = vmatpush.msra.mxu0 0.0
    %2289 = vmatpush.msra.mxu0 0.0
    %2290 = vmatpush.msra.mxu0 0.0
    %2291 = vmatpush.msra.mxu0 0.0
    %2292 = vmatpush.msra.mxu0 0.0
    %2293 = vmatpush.msra.mxu0 0.0
    %2294 = vmatpush.msra.mxu0 0.0
    %2295 = vmatpush.msra.mxu0 0.0
    %2296 = vmatpush.msra.mxu0 0.0
    %2297 = vmatpush.msra.mxu0 0.0
    %2298 = vmatpush.msra.mxu0 0.0
    %2299 = vmatpush.msra.mxu0 0.0
    %v2300 = vand.u32 %v147, 4294901760
    %2301 = vmatpush.msra.mxu0 %v2300
    %v2302 = vand.u32 %v146, 4294901760
    %2303 = vmatpush.msra.mxu0 %v2302
    %v2304 = vand.u32 %v154, 4294901760
    %v2305 = vsub.f32 %v154, %v2304
    %v2306 = vand.u32 %v2305, 4294901760
    %2307 = vmatmul.f32.gmra.mxu0 %v2306
    %v2308 = vpop.f32.mrf.mxu0
    %v2309 = vadd.f32 %v2284, %v2308
    %2310 = vdwg.mxu0
    %2311 = vmatpush.msra.mxu0 0.0
    %2312 = vmatpush.msra.mxu0 0.0
    %2313 = vmatpush.msra.mxu0 0.0
    %2314 = vmatpush.msra.mxu0 0.0
    %2315 = vmatpush.msra.mxu0 0.0
    %2316 = vmatpush.msra.mxu0 0.0
    %2317 = vmatpush.msra.mxu0 0.0
    %2318 = vmatpush.msra.mxu0 0.0
    %2319 = vmatpush.msra.mxu0 0.0
    %2320 = vmatpush.msra.mxu0 0.0
    %2321 = vmatpush.msra.mxu0 0.0
    %2322 = vmatpush.msra.mxu0 0.0
    %2323 = vmatpush.msra.mxu0 0.0
    %2324 = vmatpush.msra.mxu0 0.0
    %v2325 = vand.u32 %v147, 4294901760
    %v2326 = vsub.f32 %v147, %v2325
    %v2327 = vand.u32 %v2326, 4294901760
    %2328 = vmatpush.msra.mxu0 %v2327
    %v2329 = vand.u32 %v146, 4294901760
    %v2330 = vsub.f32 %v146, %v2329
    %v2331 = vand.u32 %v2330, 4294901760
    %2332 = vmatpush.msra.mxu0 %v2331
    %v2333 = vand.u32 %v154, 4294901760
    %2334 = vmatmul.f32.gmra.mxu0 %v2333
    %v2335 = vpop.f32.mrf.mxu0
    %v2336 = vadd.f32 %v2309, %v2335
    %2337 = vdwg.mxu0
    %2338 = vmatpush.msra.mxu0 0.0
    %2339 = vmatpush.msra.mxu0 0.0
    %2340 = vmatpush.msra.mxu0 0.0
    %2341 = vmatpush.msra.mxu0 0.0
    %2342 = vmatpush.msra.mxu0 0.0
    %2343 = vmatpush.msra.mxu0 0.0
    %2344 = vmatpush.msra.mxu0 0.0
    %2345 = vmatpush.msra.mxu0 0.0
    %2346 = vmatpush.msra.mxu0 0.0
    %2347 = vmatpush.msra.mxu0 0.0
    %2348 = vmatpush.msra.mxu0 0.0
    %2349 = vmatpush.msra.mxu0 0.0
    %2350 = vmatpush.msra.mxu0 0.0
    %2351 = vmatpush.msra.mxu0 0.0
    %v2352 = vand.u32 %v147, 4294901760
    %2353 = vmatpush.msra.mxu0 %v2352
    %v2354 = vand.u32 %v146, 4294901760
    %2355 = vmatpush.msra.mxu0 %v2354
    %v2356 = vand.u32 %v154, 4294901760
    %2357 = vmatmul.f32.gmra.mxu0 %v2356
    %v2358 = vpop.f32.mrf.mxu0
    %v2359 = vadd.f32 %v2336, %v2358
    %2360 = vdwg.mxu0
    %v2361 = vmax.f32 %v2359, 0.0
    %v2362 = vld [vmem:[%s3] sm:$0xff]
    %v2363 = vld [vmem:[%s3 + $0x8] sm:$0xff]
    %v2364 = vld [vmem:[%s3 + $0x10] sm:$0xff]
    %v2365 = vld [vmem:[%s3 + $0x18] sm:$0xff]
    %v2366 = vld [vmem:[%s3 + $0x20] sm:$0xff]
    %v2367 = vld [vmem:[%s3 + $0x28] sm:$0xff]
    %v2368 = vld [vmem:[%s3 + $0x30] sm:$0xff]
    %v2369 = vld [vmem:[%s3 + $0x38] sm:$0xff]
    %v2370 = vld [vmem:[%s3 + $0x40] sm:$0xff]
    %v2371 = vld [vmem:[%s3 + $0x48] sm:$0xff]
    %v2372 = vld [vmem:[%s3 + $0x50] sm:$0xff]
    %v2373 = vld [vmem:[%s3 + $0x58] sm:$0xff]
    %v2374 = vld [vmem:[%s3 + $0x60] sm:$0xff]
    %v2375 = vld [vmem:[%s3 + $0x68] sm:$0xff]
    %v2376 = vld [vmem:[%s3 + $0x70] sm:$0xff]
    %v2377 = vld [vmem:[%s3 + $0x78] sm:$0xff]
    %v2378 = vld [vmem:[%s4] sm:$0x1]
    %v2380 = vperm.slane %v2378, 0
    %v2382 = vand.u32 %v2377, 4294901760
    %2383 = vmatpush.msra.mxu0 %v2382
    %v2384 = vand.u32 %v2376, 4294901760
    %2385 = vmatpush.msra.mxu0 %v2384
    %v2386 = vand.u32 %v2375, 4294901760
    %2387 = vmatpush.msra.mxu0 %v2386
    %v2388 = vand.u32 %v2374, 4294901760
    %2389 = vmatpush.msra.mxu0 %v2388
    %v2390 = vand.u32 %v2373, 4294901760
    %2391 = vmatpush.msra.mxu0 %v2390
    %v2392 = vand.u32 %v2372, 4294901760
    %2393 = vmatpush.msra.mxu0 %v2392
    %v2394 = vand.u32 %v2371, 4294901760
    %2395 = vmatpush.msra.mxu0 %v2394
    %v2396 = vand.u32 %v2370, 4294901760
    %2397 = vmatpush.msra.mxu0 %v2396
    %v2398 = vand.u32 %v2369, 4294901760
    %2399 = vmatpush.msra.mxu0 %v2398
    %v2400 = vand.u32 %v2368, 4294901760
    %2401 = vmatpush.msra.mxu0 %v2400
    %v2402 = vand.u32 %v2367, 4294901760
    %2403 = vmatpush.msra.mxu0 %v2402
    %v2404 = vand.u32 %v2366, 4294901760
    %2405 = vmatpush.msra.mxu0 %v2404
    %v2406 = vand.u32 %v2365, 4294901760
    %2407 = vmatpush.msra.mxu0 %v2406
    %v2408 = vand.u32 %v2364, 4294901760
    %2409 = vmatpush.msra.mxu0 %v2408
    %v2410 = vand.u32 %v2363, 4294901760
    %2411 = vmatpush.msra.mxu0 %v2410
    %v2412 = vand.u32 %v2362, 4294901760
    %2413 = vmatpush.msra.mxu0 %v2412
    %v2414 = vand.u32 %v2361, 4294901760
    %v2415 = vsub.f32 %v2361, %v2414
    %v2416 = vand.u32 %v2415, 4294901760
    %v2417 = vsub.f32 %v2415, %v2416
    %v2418 = vand.u32 %v2417, 4294901760
    %2419 = vmatmul.f32.gmra.mxu0 %v2418
    %v2420 = vpop.f32.mrf.mxu0
    %v2421 = vadd.f32 %v2380, %v2420
    %2422 = vdwg.mxu0
    %v2423 = vand.u32 %v2377, 4294901760
    %v2424 = vsub.f32 %v2377, %v2423
    %v2425 = vand.u32 %v2424, 4294901760
    %v2426 = vsub.f32 %v2424, %v2425
    %v2427 = vand.u32 %v2426, 4294901760
    %2428 = vmatpush.msra.mxu0 %v2427
    %v2429 = vand.u32 %v2376, 4294901760
    %v2430 = vsub.f32 %v2376, %v2429
    %v2431 = vand.u32 %v2430, 4294901760
    %v2432 = vsub.f32 %v2430, %v2431
    %v2433 = vand.u32 %v2432, 4294901760
    %2434 = vmatpush.msra.mxu0 %v2433
    %v2435 = vand.u32 %v2375, 4294901760
    %v2436 = vsub.f32 %v2375, %v2435
    %v2437 = vand.u32 %v2436, 4294901760
    %v2438 = vsub.f32 %v2436, %v2437
    %v2439 = vand.u32 %v2438, 4294901760
    %2440 = vmatpush.msra.mxu0 %v2439
    %v2441 = vand.u32 %v2374, 4294901760
    %v2442 = vsub.f32 %v2374, %v2441
    %v2443 = vand.u32 %v2442, 4294901760
    %v2444 = vsub.f32 %v2442, %v2443
    %v2445 = vand.u32 %v2444, 4294901760
    %2446 = vmatpush.msra.mxu0 %v2445
    %v2447 = vand.u32 %v2373, 4294901760
    %v2448 = vsub.f32 %v2373, %v2447
    %v2449 = vand.u32 %v2448, 4294901760
    %v2450 = vsub.f32 %v2448, %v2449
    %v2451 = vand.u32 %v2450, 4294901760
    %2452 = vmatpush.msra.mxu0 %v2451
    %v2453 = vand.u32 %v2372, 4294901760
    %v2454 = vsub.f32 %v2372, %v2453
    %v2455 = vand.u32 %v2454, 4294901760
    %v2456 = vsub.f32 %v2454, %v2455
    %v2457 = vand.u32 %v2456, 4294901760
    %2458 = vmatpush.msra.mxu0 %v2457
    %v2459 = vand.u32 %v2371, 4294901760
    %v2460 = vsub.f32 %v2371, %v2459
    %v2461 = vand.u32 %v2460, 4294901760
    %v2462 = vsub.f32 %v2460, %v2461
    %v2463 = vand.u32 %v2462, 4294901760
    %2464 = vmatpush.msra.mxu0 %v2463
    %v2465 = vand.u32 %v2370, 4294901760
    %v2466 = vsub.f32 %v2370, %v2465
    %v2467 = vand.u32 %v2466, 4294901760
    %v2468 = vsub.f32 %v2466, %v2467
    %v2469 = vand.u32 %v2468, 4294901760
    %2470 = vmatpush.msra.mxu0 %v2469
    %v2471 = vand.u32 %v2369, 4294901760
    %v2472 = vsub.f32 %v2369, %v2471
    %v2473 = vand.u32 %v2472, 4294901760
    %v2474 = vsub.f32 %v2472, %v2473
    %v2475 = vand.u32 %v2474, 4294901760
    %2476 = vmatpush.msra.mxu0 %v2475
    %v2477 = vand.u32 %v2368, 4294901760
    %v2478 = vsub.f32 %v2368, %v2477
    %v2479 = vand.u32 %v2478, 4294901760
    %v2480 = vsub.f32 %v2478, %v2479
    %v2481 = vand.u32 %v2480, 4294901760
    %2482 = vmatpush.msra.mxu0 %v2481
    %v2483 = vand.u32 %v2367, 4294901760
    %v2484 = vsub.f32 %v2367, %v2483
    %v2485 = vand.u32 %v2484, 4294901760
    %v2486 = vsub.f32 %v2484, %v2485
    %v2487 = vand.u32 %v2486, 4294901760
    %2488 = vmatpush.msra.mxu0 %v2487
    %v2489 = vand.u32 %v2366, 4294901760
    %v2490 = vsub.f32 %v2366, %v2489
    %v2491 = vand.u32 %v2490, 4294901760
    %v2492 = vsub.f32 %v2490, %v2491
    %v2493 = vand.u32 %v2492, 4294901760
    %2494 = vmatpush.msra.mxu0 %v2493
    %v2495 = vand.u32 %v2365, 4294901760
    %v2496 = vsub.f32 %v2365, %v2495
    %v2497 = vand.u32 %v2496, 4294901760
    %v2498 = vsub.f32 %v2496, %v2497
    %v2499 = vand.u32 %v2498, 4294901760
    %2500 = vmatpush.msra.mxu0 %v2499
    %v2501 = vand.u32 %v2364, 4294901760
    %v2502 = vsub.f32 %v2364, %v2501
    %v2503 = vand.u32 %v2502, 4294901760
    %v2504 = vsub.f32 %v2502, %v2503
    %v2505 = vand.u32 %v2504, 4294901760
    %2506 = vmatpush.msra.mxu0 %v2505
    %v2507 = vand.u32 %v2363, 4294901760
    %v2508 = vsub.f32 %v2363, %v2507
    %v2509 = vand.u32 %v2508, 4294901760
    %v2510 = vsub.f32 %v2508, %v2509
    %v2511 = vand.u32 %v2510, 4294901760
    %2512 = vmatpush.msra.mxu0 %v2511
    %v2513 = vand.u32 %v2362, 4294901760
    %v2514 = vsub.f32 %v2362, %v2513
    %v2515 = vand.u32 %v2514, 4294901760
    %v2516 = vsub.f32 %v2514, %v2515
    %v2517 = vand.u32 %v2516, 4294901760
    %2518 = vmatpush.msra.mxu0 %v2517
    %v2519 = vand.u32 %v2361, 4294901760
    %2520 = vmatmul.f32.gmra.mxu0 %v2519
    %v2521 = vpop.f32.mrf.mxu0
    %v2522 = vadd.f32 %v2421, %v2521
    %2523 = vdwg.mxu0
    %v2524 = vand.u32 %v2377, 4294901760
    %v2525 = vsub.f32 %v2377, %v2524
    %2526 = vmatpush.msra.mxu0 %v2525
    %v2527 = vand.u32 %v2376, 4294901760
    %v2528 = vsub.f32 %v2376, %v2527
    %2529 = vmatpush.msra.mxu0 %v2528
    %v2530 = vand.u32 %v2375, 4294901760
    %v2531 = vsub.f32 %v2375, %v2530
    %2532 = vmatpush.msra.mxu0 %v2531
    %v2533 = vand.u32 %v2374, 4294901760
    %v2534 = vsub.f32 %v2374, %v2533
    %2535 = vmatpush.msra.mxu0 %v2534
    %v2536 = vand.u32 %v2373, 4294901760
    %v2537 = vsub.f32 %v2373, %v2536
    %2538 = vmatpush.msra.mxu0 %v2537
    %v2539 = vand.u32 %v2372, 4294901760
    %v2540 = vsub.f32 %v2372, %v2539
    %2541 = vmatpush.msra.mxu0 %v2540
    %v2542 = vand.u32 %v2371, 4294901760
    %v2543 = vsub.f32 %v2371, %v2542
    %2544 = vmatpush.msra.mxu0 %v2543
    %v2545 = vand.u32 %v2370, 4294901760
    %v2546 = vsub.f32 %v2370, %v2545
    %2547 = vmatpush.msra.mxu0 %v2546
    %v2548 = vand.u32 %v2369, 4294901760
    %v2549 = vsub.f32 %v2369, %v2548
    %2550 = vmatpush.msra.mxu0 %v2549
    %v2551 = vand.u32 %v2368, 4294901760
    %v2552 = vsub.f32 %v2368, %v2551
    %2553 = vmatpush.msra.mxu0 %v2552
    %v2554 = vand.u32 %v2367, 4294901760
    %v2555 = vsub.f32 %v2367, %v2554
    %2556 = vmatpush.msra.mxu0 %v2555
    %v2557 = vand.u32 %v2366, 4294901760
    %v2558 = vsub.f32 %v2366, %v2557
    %2559 = vmatpush.msra.mxu0 %v2558
    %v2560 = vand.u32 %v2365, 4294901760
    %v2561 = vsub.f32 %v2365, %v2560
    %2562 = vmatpush.msra.mxu0 %v2561
    %v2563 = vand.u32 %v2364, 4294901760
    %v2564 = vsub.f32 %v2364, %v2563
    %2565 = vmatpush.msra.mxu0 %v2564
    %v2566 = vand.u32 %v2363, 4294901760
    %v2567 = vsub.f32 %v2363, %v2566
    %2568 = vmatpush.msra.mxu0 %v2567
    %v2569 = vand.u32 %v2362, 4294901760
    %v2570 = vsub.f32 %v2362, %v2569
    %2571 = vmatpush.msra.mxu0 %v2570
    %v2572 = vand.u32 %v2361, 4294901760
    %v2573 = vsub.f32 %v2361, %v2572
    %2574 = vmatmul.f32.gmra.mxu0 %v2573
    %v2575 = vpop.f32.mrf.mxu0
    %v2576 = vadd.f32 %v2522, %v2575
    %2577 = vdwg.mxu0
    %v2578 = vand.u32 %v2377, 4294901760
    %2579 = vmatpush.msra.mxu0 %v2578
    %v2580 = vand.u32 %v2376, 4294901760
    %2581 = vmatpush.msra.mxu0 %v2580
    %v2582 = vand.u32 %v2375, 4294901760
    %2583 = vmatpush.msra.mxu0 %v2582
    %v2584 = vand.u32 %v2374, 4294901760
    %2585 = vmatpush.msra.mxu0 %v2584
    %v2586 = vand.u32 %v2373, 4294901760
    %2587 = vmatpush.msra.mxu0 %v2586
    %v2588 = vand.u32 %v2372, 4294901760
    %2589 = vmatpush.msra.mxu0 %v2588
    %v2590 = vand.u32 %v2371, 4294901760
    %2591 = vmatpush.msra.mxu0 %v2590
    %v2592 = vand.u32 %v2370, 4294901760
    %2593 = vmatpush.msra.mxu0 %v2592
    %v2594 = vand.u32 %v2369, 4294901760
    %2595 = vmatpush.msra.mxu0 %v2594
    %v2596 = vand.u32 %v2368, 4294901760
    %2597 = vmatpush.msra.mxu0 %v2596
    %v2598 = vand.u32 %v2367, 4294901760
    %2599 = vmatpush.msra.mxu0 %v2598
    %v2600 = vand.u32 %v2366, 4294901760
    %2601 = vmatpush.msra.mxu0 %v2600
    %v2602 = vand.u32 %v2365, 4294901760
    %2603 = vmatpush.msra.mxu0 %v2602
    %v2604 = vand.u32 %v2364, 4294901760
    %2605 = vmatpush.msra.mxu0 %v2604
    %v2606 = vand.u32 %v2363, 4294901760
    %2607 = vmatpush.msra.mxu0 %v2606
    %v2608 = vand.u32 %v2362, 4294901760
    %2609 = vmatpush.msra.mxu0 %v2608
    %v2610 = vand.u32 %v2361, 4294901760
    %v2611 = vsub.f32 %v2361, %v2610
    %v2612 = vand.u32 %v2611, 4294901760
    %2613 = vmatmul.f32.gmra.mxu0 %v2612
    %v2614 = vpop.f32.mrf.mxu0
    %v2615 = vadd.f32 %v2576, %v2614
    %2616 = vdwg.mxu0
    %v2617 = vand.u32 %v2377, 4294901760
    %v2618 = vsub.f32 %v2377, %v2617
    %v2619 = vand.u32 %v2618, 4294901760
    %2620 = vmatpush.msra.mxu0 %v2619
    %v2621 = vand.u32 %v2376, 4294901760
    %v2622 = vsub.f32 %v2376, %v2621
    %v2623 = vand.u32 %v2622, 4294901760
    %2624 = vmatpush.msra.mxu0 %v2623
    %v2625 = vand.u32 %v2375, 4294901760
    %v2626 = vsub.f32 %v2375, %v2625
    %v2627 = vand.u32 %v2626, 4294901760
    %2628 = vmatpush.msra.mxu0 %v2627
    %v2629 = vand.u32 %v2374, 4294901760
    %v2630 = vsub.f32 %v2374, %v2629
    %v2631 = vand.u32 %v2630, 4294901760
    %2632 = vmatpush.msra.mxu0 %v2631
    %v2633 = vand.u32 %v2373, 4294901760
    %v2634 = vsub.f32 %v2373, %v2633
    %v2635 = vand.u32 %v2634, 4294901760
    %2636 = vmatpush.msra.mxu0 %v2635
    %v2637 = vand.u32 %v2372, 4294901760
    %v2638 = vsub.f32 %v2372, %v2637
    %v2639 = vand.u32 %v2638, 4294901760
    %2640 = vmatpush.msra.mxu0 %v2639
    %v2641 = vand.u32 %v2371, 4294901760
    %v2642 = vsub.f32 %v2371, %v2641
    %v2643 = vand.u32 %v2642, 4294901760
    %2644 = vmatpush.msra.mxu0 %v2643
    %v2645 = vand.u32 %v2370, 4294901760
    %v2646 = vsub.f32 %v2370, %v2645
    %v2647 = vand.u32 %v2646, 4294901760
    %2648 = vmatpush.msra.mxu0 %v2647
    %v2649 = vand.u32 %v2369, 4294901760
    %v2650 = vsub.f32 %v2369, %v2649
    %v2651 = vand.u32 %v2650, 4294901760
    %2652 = vmatpush.msra.mxu0 %v2651
    %v2653 = vand.u32 %v2368, 4294901760
    %v2654 = vsub.f32 %v2368, %v2653
    %v2655 = vand.u32 %v2654, 4294901760
    %2656 = vmatpush.msra.mxu0 %v2655
    %v2657 = vand.u32 %v2367, 4294901760
    %v2658 = vsub.f32 %v2367, %v2657
    %v2659 = vand.u32 %v2658, 4294901760
    %2660 = vmatpush.msra.mxu0 %v2659
    %v2661 = vand.u32 %v2366, 4294901760
    %v2662 = vsub.f32 %v2366, %v2661
    %v2663 = vand.u32 %v2662, 4294901760
    %2664 = vmatpush.msra.mxu0 %v2663
    %v2665 = vand.u32 %v2365, 4294901760
    %v2666 = vsub.f32 %v2365, %v2665
    %v2667 = vand.u32 %v2666, 4294901760
    %2668 = vmatpush.msra.mxu0 %v2667
    %v2669 = vand.u32 %v2364, 4294901760
    %v2670 = vsub.f32 %v2364, %v2669
    %v2671 = vand.u32 %v2670, 4294901760
    %2672 = vmatpush.msra.mxu0 %v2671
    %v2673 = vand.u32 %v2363, 4294901760
    %v2674 = vsub.f32 %v2363, %v2673
    %v2675 = vand.u32 %v2674, 4294901760
    %2676 = vmatpush.msra.mxu0 %v2675
    %v2677 = vand.u32 %v2362, 4294901760
    %v2678 = vsub.f32 %v2362, %v2677
    %v2679 = vand.u32 %v2678, 4294901760
    %2680 = vmatpush.msra.mxu0 %v2679
    %v2681 = vand.u32 %v2361, 4294901760
    %2682 = vmatmul.f32.gmra.mxu0 %v2681
    %v2683 = vpop.f32.mrf.mxu0
    %v2684 = vadd.f32 %v2615, %v2683
    %2685 = vdwg.mxu0
    %v2686 = vand.u32 %v2377, 4294901760
    %2687 = vmatpush.msra.mxu0 %v2686
    %v2688 = vand.u32 %v2376, 4294901760
    %2689 = vmatpush.msra.mxu0 %v2688
    %v2690 = vand.u32 %v2375, 4294901760
    %2691 = vmatpush.msra.mxu0 %v2690
    %v2692 = vand.u32 %v2374, 4294901760
    %2693 = vmatpush.msra.mxu0 %v2692
    %v2694 = vand.u32 %v2373, 4294901760
    %2695 = vmatpush.msra.mxu0 %v2694
    %v2696 = vand.u32 %v2372, 4294901760
    %2697 = vmatpush.msra.mxu0 %v2696
    %v2698 = vand.u32 %v2371, 4294901760
    %2699 = vmatpush.msra.mxu0 %v2698
    %v2700 = vand.u32 %v2370, 4294901760
    %2701 = vmatpush.msra.mxu0 %v2700
    %v2702 = vand.u32 %v2369, 4294901760
    %2703 = vmatpush.msra.mxu0 %v2702
    %v2704 = vand.u32 %v2368, 4294901760
    %2705 = vmatpush.msra.mxu0 %v2704
    %v2706 = vand.u32 %v2367, 4294901760
    %2707 = vmatpush.msra.mxu0 %v2706
    %v2708 = vand.u32 %v2366, 4294901760
    %2709 = vmatpush.msra.mxu0 %v2708
    %v2710 = vand.u32 %v2365, 4294901760
    %2711 = vmatpush.msra.mxu0 %v2710
    %v2712 = vand.u32 %v2364, 4294901760
    %2713 = vmatpush.msra.mxu0 %v2712
    %v2714 = vand.u32 %v2363, 4294901760
    %2715 = vmatpush.msra.mxu0 %v2714
    %v2716 = vand.u32 %v2362, 4294901760
    %2717 = vmatpush.msra.mxu0 %v2716
    %v2718 = vand.u32 %v2361, 4294901760
    %2719 = vmatmul.f32.gmra.mxu0 %v2718
    %v2720 = vpop.f32.mrf.mxu0
    %v2721 = vadd.f32 %v2684, %v2720
    %2722 = vdwg.mxu0
    %v2723 = vmax.f32 %v2721, 0.0
    %v2724 = vld [vmem:[%s5] sm:$0xff]
    %v2725 = vld [vmem:[%s5 + $0x8] sm:$0xff]
    %v2726 = vld [vmem:[%s5 + $0x10] sm:$0xff]
    %v2727 = vld [vmem:[%s5 + $0x18] sm:$0xff]
    %v2728 = vld [vmem:[%s5 + $0x20] sm:$0xff]
    %v2729 = vld [vmem:[%s5 + $0x28] sm:$0xff]
    %v2730 = vld [vmem:[%s5 + $0x30] sm:$0xff]
    %v2731 = vld [vmem:[%s5 + $0x38] sm:$0xff]
    %v2732 = vld [vmem:[%s6] sm:$0x1]
    %v2734 = vperm.slane %v2732, 0
    %vm2736 = vcmask 523264
    %v2738 = vsel %vm2736, %v2723, 0
    %2740 = vmatpush.msra.mxu0 0.0
    %2741 = vmatpush.msra.mxu0 0.0
    %2742 = vmatpush.msra.mxu0 0.0
    %2743 = vmatpush.msra.mxu0 0.0
    %2744 = vmatpush.msra.mxu0 0.0
    %2745 = vmatpush.msra.mxu0 0.0
    %2746 = vmatpush.msra.mxu0 0.0
    %2747 = vmatpush.msra.mxu0 0.0
    %v2748 = vand.u32 %v2731, 4294901760
    %2749 = vmatpush.msra.mxu0 %v2748
    %v2750 = vand.u32 %v2730, 4294901760
    %2751 = vmatpush.msra.mxu0 %v2750
    %v2752 = vand.u32 %v2729, 4294901760
    %2753 = vmatpush.msra.mxu0 %v2752
    %v2754 = vand.u32 %v2728, 4294901760
    %2755 = vmatpush.msra.mxu0 %v2754
    %v2756 = vand.u32 %v2727, 4294901760
    %2757 = vmatpush.msra.mxu0 %v2756
    %v2758 = vand.u32 %v2726, 4294901760
    %2759 = vmatpush.msra.mxu0 %v2758
    %v2760 = vand.u32 %v2725, 4294901760
    %2761 = vmatpush.msra.mxu0 %v2760
    %v2762 = vand.u32 %v2724, 4294901760
    %2763 = vmatpush.msra.mxu0 %v2762
    %v2764 = vand.u32 %v2738, 4294901760
    %v2765 = vsub.f32 %v2738, %v2764
    %v2766 = vand.u32 %v2765, 4294901760
    %v2767 = vsub.f32 %v2765, %v2766
    %v2768 = vand.u32 %v2767, 4294901760
    %2769 = vmatmul.f32.gmra.mxu0 %v2768
    %v2770 = vpop.f32.mrf.mxu0
    %v2771 = vadd.f32 %v2734, %v2770
    %2772 = vdwg.mxu0
    %2773 = vmatpush.msra.mxu0 0.0
    %2774 = vmatpush.msra.mxu0 0.0
    %2775 = vmatpush.msra.mxu0 0.0
    %2776 = vmatpush.msra.mxu0 0.0
    %2777 = vmatpush.msra.mxu0 0.0
    %2778 = vmatpush.msra.mxu0 0.0
    %2779 = vmatpush.msra.mxu0 0.0
    %2780 = vmatpush.msra.mxu0 0.0
    %v2781 = vand.u32 %v2731, 4294901760
    %v2782 = vsub.f32 %v2731, %v2781
    %v2783 = vand.u32 %v2782, 4294901760
    %v2784 = vsub.f32 %v2782, %v2783
    %v2785 = vand.u32 %v2784, 4294901760
    %2786 = vmatpush.msra.mxu0 %v2785
    %v2787 = vand.u32 %v2730, 4294901760
    %v2788 = vsub.f32 %v2730, %v2787
    %v2789 = vand.u32 %v2788, 4294901760
    %v2790 = vsub.f32 %v2788, %v2789
    %v2791 = vand.u32 %v2790, 4294901760
    %2792 = vmatpush.msra.mxu0 %v2791
    %v2793 = vand.u32 %v2729, 4294901760
    %v2794 = vsub.f32 %v2729, %v2793
    %v2795 = vand.u32 %v2794, 4294901760
    %v2796 = vsub.f32 %v2794, %v2795
    %v2797 = vand.u32 %v2796, 4294901760
    %2798 = vmatpush.msra.mxu0 %v2797
    %v2799 = vand.u32 %v2728, 4294901760
    %v2800 = vsub.f32 %v2728, %v2799
    %v2801 = vand.u32 %v2800, 4294901760
    %v2802 = vsub.f32 %v2800, %v2801
    %v2803 = vand.u32 %v2802, 4294901760
    %2804 = vmatpush.msra.mxu0 %v2803
    %v2805 = vand.u32 %v2727, 4294901760
    %v2806 = vsub.f32 %v2727, %v2805
    %v2807 = vand.u32 %v2806, 4294901760
    %v2808 = vsub.f32 %v2806, %v2807
    %v2809 = vand.u32 %v2808, 4294901760
    %2810 = vmatpush.msra.mxu0 %v2809
    %v2811 = vand.u32 %v2726, 4294901760
    %v2812 = vsub.f32 %v2726, %v2811
    %v2813 = vand.u32 %v2812, 4294901760
    %v2814 = vsub.f32 %v2812, %v2813
    %v2815 = vand.u32 %v2814, 4294901760
    %2816 = vmatpush.msra.mxu0 %v2815
    %v2817 = vand.u32 %v2725, 4294901760
    %v2818 = vsub.f32 %v2725, %v2817
    %v2819 = vand.u32 %v2818, 4294901760
    %v2820 = vsub.f32 %v2818, %v2819
    %v2821 = vand.u32 %v2820, 4294901760
    %2822 = vmatpush.msra.mxu0 %v2821
    %v2823 = vand.u32 %v2724, 4294901760
    %v2824 = vsub.f32 %v2724, %v2823
    %v2825 = vand.u32 %v2824, 4294901760
    %v2826 = vsub.f32 %v2824, %v2825
    %v2827 = vand.u32 %v2826, 4294901760
    %2828 = vmatpush.msra.mxu0 %v2827
    %v2829 = vand.u32 %v2738, 4294901760
    %2830 = vmatmul.f32.gmra.mxu0 %v2829
    %v2831 = vpop.f32.mrf.mxu0
    %v2832 = vadd.f32 %v2771, %v2831
    %2833 = vdwg.mxu0
    %2834 = vmatpush.msra.mxu0 0.0
    %2835 = vmatpush.msra.mxu0 0.0
    %2836 = vmatpush.msra.mxu0 0.0
    %2837 = vmatpush.msra.mxu0 0.0
    %2838 = vmatpush.msra.mxu0 0.0
    %2839 = vmatpush.msra.mxu0 0.0
    %2840 = vmatpush.msra.mxu0 0.0
    %2841 = vmatpush.msra.mxu0 0.0
    %v2842 = vand.u32 %v2731, 4294901760
    %v2843 = vsub.f32 %v2731, %v2842
    %2844 = vmatpush.msra.mxu0 %v2843
    %v2845 = vand.u32 %v2730, 4294901760
    %v2846 = vsub.f32 %v2730, %v2845
    %2847 = vmatpush.msra.mxu0 %v2846
    %v2848 = vand.u32 %v2729, 4294901760
    %v2849 = vsub.f32 %v2729, %v2848
    %2850 = vmatpush.msra.mxu0 %v2849
    %v2851 = vand.u32 %v2728, 4294901760
    %v2852 = vsub.f32 %v2728, %v2851
    %2853 = vmatpush.msra.mxu0 %v2852
    %v2854 = vand.u32 %v2727, 4294901760
    %v2855 = vsub.f32 %v2727, %v2854
    %2856 = vmatpush.msra.mxu0 %v2855
    %v2857 = vand.u32 %v2726, 4294901760
    %v2858 = vsub.f32 %v2726, %v2857
    %2859 = vmatpush.msra.mxu0 %v2858
    %v2860 = vand.u32 %v2725, 4294901760
    %v2861 = vsub.f32 %v2725, %v2860
    %2862 = vmatpush.msra.mxu0 %v2861
    %v2863 = vand.u32 %v2724, 4294901760
    %v2864 = vsub.f32 %v2724, %v2863
    %2865 = vmatpush.msra.mxu0 %v2864
    %v2866 = vand.u32 %v2738, 4294901760
    %v2867 = vsub.f32 %v2738, %v2866
    %2868 = vmatmul.f32.gmra.mxu0 %v2867
    %v2869 = vpop.f32.mrf.mxu0
    %v2870 = vadd.f32 %v2832, %v2869
    %2871 = vdwg.mxu0
    %2872 = vmatpush.msra.mxu0 0.0
    %2873 = vmatpush.msra.mxu0 0.0
    %2874 = vmatpush.msra.mxu0 0.0
    %2875 = vmatpush.msra.mxu0 0.0
    %2876 = vmatpush.msra.mxu0 0.0
    %2877 = vmatpush.msra.mxu0 0.0
    %2878 = vmatpush.msra.mxu0 0.0
    %2879 = vmatpush.msra.mxu0 0.0
    %v2880 = vand.u32 %v2731, 4294901760
    %2881 = vmatpush.msra.mxu0 %v2880
    %v2882 = vand.u32 %v2730, 4294901760
    %2883 = vmatpush.msra.mxu0 %v2882
    %v2884 = vand.u32 %v2729, 4294901760
    %2885 = vmatpush.msra.mxu0 %v2884
    %v2886 = vand.u32 %v2728, 4294901760
    %2887 = vmatpush.msra.mxu0 %v2886
    %v2888 = vand.u32 %v2727, 4294901760
    %2889 = vmatpush.msra.mxu0 %v2888
    %v2890 = vand.u32 %v2726, 4294901760
    %2891 = vmatpush.msra.mxu0 %v2890
    %v2892 = vand.u32 %v2725, 4294901760
    %2893 = vmatpush.msra.mxu0 %v2892
    %v2894 = vand.u32 %v2724, 4294901760
    %2895 = vmatpush.msra.mxu0 %v2894
    %v2896 = vand.u32 %v2738, 4294901760
    %v2897 = vsub.f32 %v2738, %v2896
    %v2898 = vand.u32 %v2897, 4294901760
    %2899 = vmatmul.f32.gmra.mxu0 %v2898
    %v2900 = vpop.f32.mrf.mxu0
    %v2901 = vadd.f32 %v2870, %v2900
    %2902 = vdwg.mxu0
    %2903 = vmatpush.msra.mxu0 0.0
    %2904 = vmatpush.msra.mxu0 0.0
    %2905 = vmatpush.msra.mxu0 0.0
    %2906 = vmatpush.msra.mxu0 0.0
    %2907 = vmatpush.msra.mxu0 0.0
    %2908 = vmatpush.msra.mxu0 0.0
    %2909 = vmatpush.msra.mxu0 0.0
    %2910 = vmatpush.msra.mxu0 0.0
    %v2911 = vand.u32 %v2731, 4294901760
    %v2912 = vsub.f32 %v2731, %v2911
    %v2913 = vand.u32 %v2912, 4294901760
    %2914 = vmatpush.msra.mxu0 %v2913
    %v2915 = vand.u32 %v2730, 4294901760
    %v2916 = vsub.f32 %v2730, %v2915
    %v2917 = vand.u32 %v2916, 4294901760
    %2918 = vmatpush.msra.mxu0 %v2917
    %v2919 = vand.u32 %v2729, 4294901760
    %v2920 = vsub.f32 %v2729, %v2919
    %v2921 = vand.u32 %v2920, 4294901760
    %2922 = vmatpush.msra.mxu0 %v2921
    %v2923 = vand.u32 %v2728, 4294901760
    %v2924 = vsub.f32 %v2728, %v2923
    %v2925 = vand.u32 %v2924, 4294901760
    %2926 = vmatpush.msra.mxu0 %v2925
    %v2927 = vand.u32 %v2727, 4294901760
    %v2928 = vsub.f32 %v2727, %v2927
    %v2929 = vand.u32 %v2928, 4294901760
    %2930 = vmatpush.msra.mxu0 %v2929
    %v2931 = vand.u32 %v2726, 4294901760
    %v2932 = vsub.f32 %v2726, %v2931
    %v2933 = vand.u32 %v2932, 4294901760
    %2934 = vmatpush.msra.mxu0 %v2933
    %v2935 = vand.u32 %v2725, 4294901760
    %v2936 = vsub.f32 %v2725, %v2935
    %v2937 = vand.u32 %v2936, 4294901760
    %2938 = vmatpush.msra.mxu0 %v2937
    %v2939 = vand.u32 %v2724, 4294901760
    %v2940 = vsub.f32 %v2724, %v2939
    %v2941 = vand.u32 %v2940, 4294901760
    %2942 = vmatpush.msra.mxu0 %v2941
    %v2943 = vand.u32 %v2738, 4294901760
    %2944 = vmatmul.f32.gmra.mxu0 %v2943
    %v2945 = vpop.f32.mrf.mxu0
    %v2946 = vadd.f32 %v2901, %v2945
    %2947 = vdwg.mxu0
    %2948 = vmatpush.msra.mxu0 0.0
    %2949 = vmatpush.msra.mxu0 0.0
    %2950 = vmatpush.msra.mxu0 0.0
    %2951 = vmatpush.msra.mxu0 0.0
    %2952 = vmatpush.msra.mxu0 0.0
    %2953 = vmatpush.msra.mxu0 0.0
    %2954 = vmatpush.msra.mxu0 0.0
    %2955 = vmatpush.msra.mxu0 0.0
    %v2956 = vand.u32 %v2731, 4294901760
    %2957 = vmatpush.msra.mxu0 %v2956
    %v2958 = vand.u32 %v2730, 4294901760
    %2959 = vmatpush.msra.mxu0 %v2958
    %v2960 = vand.u32 %v2729, 4294901760
    %2961 = vmatpush.msra.mxu0 %v2960
    %v2962 = vand.u32 %v2728, 4294901760
    %2963 = vmatpush.msra.mxu0 %v2962
    %v2964 = vand.u32 %v2727, 4294901760
    %2965 = vmatpush.msra.mxu0 %v2964
    %v2966 = vand.u32 %v2726, 4294901760
    %2967 = vmatpush.msra.mxu0 %v2966
    %v2968 = vand.u32 %v2725, 4294901760
    %2969 = vmatpush.msra.mxu0 %v2968
    %v2970 = vand.u32 %v2724, 4294901760
    %2971 = vmatpush.msra.mxu0 %v2970
    %v2972 = vand.u32 %v2738, 4294901760
    %2973 = vmatmul.f32.gmra.mxu0 %v2972
    %v2974 = vpop.f32.mrf.mxu0
    %v2975 = vadd.f32 %v2946, %v2974
    %2976 = vdwg.mxu0
    %2977 = vst [vmem:[#allocation5] sm:$0xff] %v2975
    // Predicated region
    $region34: #{tpu_custom_call.1} parent=1 // pred_check
      _
    $region35: #{tpu_custom_call.1} parent=1 // pred_check_branch
      %2979 = sbr.rel (0) target = $region37
    $region36: #{tpu_custom_call.1} parent=1 // pred_region
      %2981 = vsyncadd [#allocation4], 0
      %s2983 = sshll.u32 [#allocation5], 4
      %s2984 = int_to_ptr.vmem [resolvable:$true] %s2983
      %s2985 = sshll.u32 %s7, 4
      %s2986 = int_to_ptr.hbm [resolvable:$true] %s2985
      %2988 = dma.vmem_to_hbm [thread:$0]  %s2984, 128, %s2986, [#allocation4]
    $region37: #{tpu_custom_call.1} parent=1 // pred_fallthru
      _
    // Predicated region
    $region38: #{tpu_custom_call.1} parent=1 // pred_check
      _
    $region39: #{tpu_custom_call.1} parent=1 // pred_check_branch
      %2990 = sbr.rel (0) target = $region41
    $region40: #{tpu_custom_call.1} parent=1 // pred_region
      %2992 = dma.done [#allocation4], 128
    $region41: #{tpu_custom_call.1} parent=1 // pred_fallthru
      _
    %2993 = vsyncpa [#allocation3], 1
    %2994 = vsyncpa [#allocation4], 1

</llo_original>
